<compile_context>
chip_gen: v7x
topology: tpu7x:2x2x1
jax: 0.10.0
libtpu: 0.0.40
codegen_flags: <defaults>
</compile_context>

<pallas_src>
import functools
import math

import jax
import jax.numpy as jnp
from jax import lax
from jax.experimental import pallas as pl
from jax.experimental.pallas import tpu as pltpu


def _mha_kernel(q_ref, kp_ref, vp_ref,
                wq_ref, bq_ref,
                wo_ref, bo_ref,
                o_ref,
                *, heads, d_k, compute_dtype):
    q = q_ref[0]           # (tq, D)  compute dtype
    kp = kp_ref[0]         # (S,  D)  compute dtype (already projected: k @ Wk + bk)
    vp = vp_ref[0]         # (S,  D)  compute dtype (already projected: v @ Wv + bv)

    tq = q.shape[0]
    d_model = q.shape[1]

    # Q projection for this query tile.  1/sqrt(d_k) is folded into wq/bq by the
    # wrapper.  Full K = d_model contraction, f32 accumulate.
    qp = jnp.dot(q, wq_ref[...], preferred_element_type=jnp.float32) + bq_ref[...]
    qp = qp.astype(compute_dtype)

    wo = wo_ref[...]       # (D, D) compute dtype

    acc = jnp.zeros((tq, d_model), jnp.float32)

    # Static unroll over heads (heads is a small static int).  The serial
    # dependence through `acc` keeps roughly one head's (tq, S) temporaries live.
    for h in range(heads):
        lo = h * d_k
        qh = qp[:, lo:lo + d_k]          # (tq, d_k)
        kh = kp[:, lo:lo + d_k]          # (S,  d_k)
        vh = vp[:, lo:lo + d_k]          # (S,  d_k)

        # scores = qh @ kh^T without materializing a transpose (contract last dims).
        s = lax.dot_general(qh, kh, (((1,), (1,)), ((), ())),
                            preferred_element_type=jnp.float32)   # (tq, S) f32

        # Numerically stable softmax over the key axis, statistics in f32.
        m = jnp.max(s, axis=-1, keepdims=True)
        p = jnp.exp(s - m)
        denom = jnp.sum(p, axis=-1, keepdims=True)

        # Normalize the small (tq, d_k) head output with an EXACT divide.
        head_out = jnp.dot(p.astype(compute_dtype), vh,
                           preferred_element_type=jnp.float32) / denom   # (tq, d_k)

        # Fold the output projection into the head loop: accumulate
        # head_out @ Wo[lo:lo+d_k, :] instead of writing a concat scratch
        # (keeps the output store lane-dense even when d_k % 128 != 0).
        acc = acc + jnp.dot(head_out.astype(compute_dtype), wo[lo:lo + d_k, :],
                            preferred_element_type=jnp.float32)

    out = acc + bo_ref[...]
    o_ref[0] = out.astype(o_ref.dtype)


def multi_head_attention(q, k, v, params, *, heads, q_tile=256,
                         use_bf16=False, vmem_limit_bytes=48 * 1024 * 1024):
    """q, k, v: (bs, S, d_model) float32.  params: dict of projection weights.

    Eval-mode forward of the PyTorch MultiHeadAttention (no mask, no dropout,
    no layer_cache).  If use_bf16=True, MXU matmuls run with bf16 operands and
    f32 accumulation (softmax math stays f32).
    """
    bs, S, d_model = q.shape
    d_k = d_model // heads
    assert heads * d_k == d_model

    tq = min(q_tile, S)
    assert S % tq == 0, "S must be divisible by the query tile size"

    out_dtype = q.dtype
    compute_dtype = jnp.bfloat16 if use_bf16 else jnp.float32

    # Fold the 1/sqrt(d_k) attention scale into the Q projection (f32, pre-cast).
    inv_scale = jnp.float32(1.0 / math.sqrt(d_k))
    wq = params["wq"] * inv_scale
    bq = (params["bq"] * inv_scale).reshape(1, d_model).astype(jnp.float32)
    wo = params["wo"]
    bo = params["bo"].reshape(1, d_model).astype(jnp.float32)

    # Hoisted K/V projections: computed ONCE per batch by XLA, not once per
    # query tile inside the kernel (perf review #1, option (a)).
    kp = k @ params["wk"] + params["bk"]
    vp = v @ params["wv"] + params["bv"]

    # Optional bf16 cast of matmul operands (biases stay f32).
    q_in = q.astype(compute_dtype)
    kp = kp.astype(compute_dtype)
    vp = vp.astype(compute_dtype)
    wq = wq.astype(compute_dtype)
    wo = wo.astype(compute_dtype)

    kernel = functools.partial(_mha_kernel, heads=heads, d_k=d_k,
                               compute_dtype=compute_dtype)

    grid = (bs, S // tq)

    q_spec = pl.BlockSpec((1, tq, d_model), lambda b, qi: (b, qi, 0))
    kv_spec = pl.BlockSpec((1, S, d_model), lambda b, qi: (b, 0, 0))
    w_spec = pl.BlockSpec((d_model, d_model), lambda b, qi: (0, 0))
    b_spec = pl.BlockSpec((1, d_model), lambda b, qi: (0, 0))
    out_spec = pl.BlockSpec((1, tq, d_model), lambda b, qi: (b, qi, 0))

    return pl.pallas_call(
        kernel,
        out_shape=jax.ShapeDtypeStruct((bs, S, d_model), out_dtype),
        grid_spec=pltpu.PrefetchScalarGridSpec(
            num_scalar_prefetch=0,
            grid=grid,
            in_specs=[q_spec, kv_spec, kv_spec,
                      w_spec, b_spec,
                      w_spec, b_spec],
            out_specs=out_spec),
        compiler_params=pltpu.CompilerParams(
            dimension_semantics=("parallel", "parallel"),
            vmem_limit_bytes=vmem_limit_bytes),
    )(q_in, kp, vp, wq, bq, wo, bo)


def _reference(q, k, v, params, *, heads):
    """Pure-JAX reference matching the PyTorch forward (eval mode, no mask)."""
    bs, S, d_model = q.shape
    d_k = d_model // heads

    def lin(x, w, b):
        return x @ w + b

    def shape(x):
        return jnp.transpose(x.reshape(bs, S, heads, d_k), (0, 2, 1, 3))

    qh = shape(lin(q, params["wq"], params["bq"]))
    kh = shape(lin(k, params["wk"], params["bk"]))
    vh = shape(lin(v, params["wv"], params["bv"]))
    scores = jnp.einsum("bhqd,bhkd->bhqk", qh, kh) / math.sqrt(d_k)
    probs = jax.nn.softmax(scores, axis=-1)
    out = jnp.einsum("bhqk,bhkd->bhqd", probs, vh)
    concat = jnp.transpose(out, (0, 2, 1, 3)).reshape(bs, S, d_model)
    return lin(concat, params["wo"], params["bo"])


if __name__ == "__main__":
    bs, S, d_model, heads = 2, 8, 32, 4

    key = jax.random.PRNGKey(0)
    keys = jax.random.split(key, 12)
    scale = 1.0 / math.sqrt(d_model)
    params = {
        "wq": jax.random.normal(keys[0], (d_model, d_model), jnp.float32) * scale,
        "bq": jax.random.normal(keys[1], (d_model,), jnp.float32) * scale,
        "wk": jax.random.normal(keys[2], (d_model, d_model), jnp.float32) * scale,
        "bk": jax.random.normal(keys[3], (d_model,), jnp.float32) * scale,
        "wv": jax.random.normal(keys[4], (d_model, d_model), jnp.float32) * scale,
        "bv": jax.random.normal(keys[5], (d_model,), jnp.float32) * scale,
        "wo": jax.random.normal(keys[6], (d_model, d_model), jnp.float32) * scale,
        "bo": jax.random.normal(keys[7], (d_model,), jnp.float32) * scale,
    }

    q = jax.random.normal(keys[8], (bs, S, d_model), jnp.float32)
    k = jax.random.normal(keys[9], (bs, S, d_model), jnp.float32)
    v = jax.random.normal(keys[10], (bs, S, d_model), jnp.float32)

    ref = _reference(q, k, v, params, heads=heads)

    # f32 path: should match the PyTorch float32 forward closely (exact softmax
    # divide, f32 MXU accumulation).
    out = multi_head_attention(q, k, v, params, heads=heads)
    out = jax.block_until_ready(out)
    assert out.shape == (bs, S, d_model)
    err_f32 = float(jnp.abs(out - ref).max())
    assert jnp.allclose(out, ref, atol=1e-3, rtol=1e-3), err_f32

    # bf16 MXU path (perf review): looser tolerance for the reduced-precision
    # operands; accumulation and softmax statistics remain f32.
    out_bf16 = multi_head_attention(q, k, v, params, heads=heads, use_bf16=True)
    out_bf16 = jax.block_until_ready(out_bf16)
    err_bf16 = float(jnp.abs(out_bf16 - ref).max())
    assert jnp.allclose(out_bf16, ref, atol=5e-2, rtol=5e-2), err_bf16

    print("KERNEL_OK")
</pallas_src>

<mosaic_0001>
module attributes {stable_mosaic.version = 11 : i64} {
  func.func @_mha_kernel(%arg0: i32, %arg1: i32, %arg2: memref<1x8x32xf32, #tpu.memory_space<vmem>>, %arg3: memref<1x8x32xf32, #tpu.memory_space<vmem>>, %arg4: memref<1x8x32xf32, #tpu.memory_space<vmem>>, %arg5: memref<32x32xf32, #tpu.memory_space<vmem>>, %arg6: memref<1x32xf32, #tpu.memory_space<vmem>>, %arg7: memref<32x32xf32, #tpu.memory_space<vmem>>, %arg8: memref<1x32xf32, #tpu.memory_space<vmem>>, %arg9: memref<1x8x32xf32, #tpu.memory_space<vmem>>) attributes {dimension_semantics = [#tpu.dimension_semantics<parallel>, #tpu.dimension_semantics<parallel>], iteration_bounds = array<i64: 2, 1>, scalar_prefetch = 0 : i64, scratch_operands = 0 : i64, tpu.core_type = #tpu.core_type<tc>, window_params = [{transform_indices = @transform_0, window_bounds = array<i64: 1, 8, 32>}, {transform_indices = @transform_1, window_bounds = array<i64: 1, 8, 32>}, {transform_indices = @transform_2, window_bounds = array<i64: 1, 8, 32>}, {pipeline_mode = #tpu.pipeline_mode<synchronous>, transform_indices = @transform_3, window_bounds = array<i64: 32, 32>}, {pipeline_mode = #tpu.pipeline_mode<synchronous>, transform_indices = @transform_4, window_bounds = array<i64: 1, 32>}, {pipeline_mode = #tpu.pipeline_mode<synchronous>, transform_indices = @transform_5, window_bounds = array<i64: 32, 32>}, {pipeline_mode = #tpu.pipeline_mode<synchronous>, transform_indices = @transform_6, window_bounds = array<i64: 1, 32>}, {transform_indices = @transform_7, window_bounds = array<i64: 1, 8, 32>}]} {
    %c0 = arith.constant 0 : index
    %c0_0 = arith.constant 0 : index
    %c0_1 = arith.constant 0 : index
    %0 = vector.load %arg2[%c0, %c0_0, %c0_1] : memref<1x8x32xf32, #tpu.memory_space<vmem>>, vector<1x8x32xf32>
    %1 = vector.shape_cast %0 : vector<1x8x32xf32> to vector<8x32xf32>
    %c0_2 = arith.constant 0 : index
    %c0_3 = arith.constant 0 : index
    %c0_4 = arith.constant 0 : index
    %2 = vector.load %arg3[%c0_2, %c0_3, %c0_4] : memref<1x8x32xf32, #tpu.memory_space<vmem>>, vector<1x8x32xf32>
    %3 = vector.shape_cast %2 : vector<1x8x32xf32> to vector<8x32xf32>
    %c0_5 = arith.constant 0 : index
    %c0_6 = arith.constant 0 : index
    %c0_7 = arith.constant 0 : index
    %4 = vector.load %arg4[%c0_5, %c0_6, %c0_7] : memref<1x8x32xf32, #tpu.memory_space<vmem>>, vector<1x8x32xf32>
    %5 = vector.shape_cast %4 : vector<1x8x32xf32> to vector<8x32xf32>
    %c0_8 = arith.constant 0 : index
    %c0_9 = arith.constant 0 : index
    %6 = vector.load %arg5[%c0_8, %c0_9] : memref<32x32xf32, #tpu.memory_space<vmem>>, vector<32x32xf32>
    %cst = arith.constant dense<0.000000e+00> : vector<8x32xf32>
    %7 = tpu.matmul %1, %6, %cst {dimension_numbers = #tpu.dot_dimension_numbers<[1], [0], [0], [1], [0, 0, 1, 1], [], []>} : vector<8x32xf32>, vector<32x32xf32>, vector<8x32xf32> -> vector<8x32xf32>
    %c0_10 = arith.constant 0 : index
    %c0_11 = arith.constant 0 : index
    %8 = vector.load %arg6[%c0_10, %c0_11] : memref<1x32xf32, #tpu.memory_space<vmem>>, vector<1x32xf32>
    %9 = vector.broadcast %8 : vector<1x32xf32> to vector<8x32xf32>
    %10 = arith.addf %7, %9 : vector<8x32xf32>
    %c0_12 = arith.constant 0 : index
    %c0_13 = arith.constant 0 : index
    %11 = vector.load %arg7[%c0_12, %c0_13] : memref<32x32xf32, #tpu.memory_space<vmem>>, vector<32x32xf32>
    %cst_14 = arith.constant 0.000000e+00 : f32
    %12 = vector.broadcast %cst_14 : f32 to vector<8x32xf32>
    %13 = vector.extract_strided_slice %10 {offsets = [0, 0], sizes = [8, 8], strides = [1, 1]} : vector<8x32xf32> to vector<8x8xf32>
    %14 = vector.extract_strided_slice %3 {offsets = [0, 0], sizes = [8, 8], strides = [1, 1]} : vector<8x32xf32> to vector<8x8xf32>
    %15 = vector.extract_strided_slice %5 {offsets = [0, 0], sizes = [8, 8], strides = [1, 1]} : vector<8x32xf32> to vector<8x8xf32>
    %cst_15 = arith.constant dense<0.000000e+00> : vector<8x8xf32>
    %16 = tpu.matmul %13, %14, %cst_15 {dimension_numbers = #tpu.dot_dimension_numbers<[1], [1], [0], [0], [0, 0, 1, 0], [], []>} : vector<8x8xf32>, vector<8x8xf32>, vector<8x8xf32> -> vector<8x8xf32>
    %cst_16 = arith.constant dense<0xFF800000> : vector<8xf32>
    %17 = vector.multi_reduction <maximumf>, %16, %cst_16 [1] : vector<8x8xf32> to vector<8xf32>
    %18 = vector.shape_cast %17 : vector<8xf32> to vector<8x1xf32>
    %19 = vector.broadcast %18 : vector<8x1xf32> to vector<8x8xf32>
    %20 = arith.subf %16, %19 : vector<8x8xf32>
    %21 = math.exp %20 : vector<8x8xf32>
    %cst_17 = arith.constant dense<0.000000e+00> : vector<8xf32>
    %22 = vector.multi_reduction <add>, %21, %cst_17 [1] : vector<8x8xf32> to vector<8xf32>
    %23 = vector.shape_cast %22 : vector<8xf32> to vector<8x1xf32>
    %cst_18 = arith.constant dense<0.000000e+00> : vector<8x8xf32>
    %24 = tpu.matmul %21, %15, %cst_18 {dimension_numbers = #tpu.dot_dimension_numbers<[1], [0], [0], [1], [0, 0, 1, 1], [], []>} : vector<8x8xf32>, vector<8x8xf32>, vector<8x8xf32> -> vector<8x8xf32>
    %25 = vector.broadcast %23 : vector<8x1xf32> to vector<8x8xf32>
    %26 = arith.divf %24, %25 : vector<8x8xf32>
    %27 = vector.extract_strided_slice %11 {offsets = [0, 0], sizes = [8, 32], strides = [1, 1]} : vector<32x32xf32> to vector<8x32xf32>
    %cst_19 = arith.constant dense<0.000000e+00> : vector<8x32xf32>
    %28 = tpu.matmul %26, %27, %cst_19 {dimension_numbers = #tpu.dot_dimension_numbers<[1], [0], [0], [1], [0, 0, 1, 1], [], []>} : vector<8x8xf32>, vector<8x32xf32>, vector<8x32xf32> -> vector<8x32xf32>
    %29 = arith.addf %12, %28 : vector<8x32xf32>
    %30 = vector.extract_strided_slice %10 {offsets = [0, 8], sizes = [8, 8], strides = [1, 1]} : vector<8x32xf32> to vector<8x8xf32>
    %31 = vector.extract_strided_slice %3 {offsets = [0, 8], sizes = [8, 8], strides = [1, 1]} : vector<8x32xf32> to vector<8x8xf32>
    %32 = vector.extract_strided_slice %5 {offsets = [0, 8], sizes = [8, 8], strides = [1, 1]} : vector<8x32xf32> to vector<8x8xf32>
    %cst_20 = arith.constant dense<0.000000e+00> : vector<8x8xf32>
    %33 = tpu.matmul %30, %31, %cst_20 {dimension_numbers = #tpu.dot_dimension_numbers<[1], [1], [0], [0], [0, 0, 1, 0], [], []>} : vector<8x8xf32>, vector<8x8xf32>, vector<8x8xf32> -> vector<8x8xf32>
    %cst_21 = arith.constant dense<0xFF800000> : vector<8xf32>
    %34 = vector.multi_reduction <maximumf>, %33, %cst_21 [1] : vector<8x8xf32> to vector<8xf32>
    %35 = vector.shape_cast %34 : vector<8xf32> to vector<8x1xf32>
    %36 = vector.broadcast %35 : vector<8x1xf32> to vector<8x8xf32>
    %37 = arith.subf %33, %36 : vector<8x8xf32>
    %38 = math.exp %37 : vector<8x8xf32>
    %cst_22 = arith.constant dense<0.000000e+00> : vector<8xf32>
    %39 = vector.multi_reduction <add>, %38, %cst_22 [1] : vector<8x8xf32> to vector<8xf32>
    %40 = vector.shape_cast %39 : vector<8xf32> to vector<8x1xf32>
    %cst_23 = arith.constant dense<0.000000e+00> : vector<8x8xf32>
    %41 = tpu.matmul %38, %32, %cst_23 {dimension_numbers = #tpu.dot_dimension_numbers<[1], [0], [0], [1], [0, 0, 1, 1], [], []>} : vector<8x8xf32>, vector<8x8xf32>, vector<8x8xf32> -> vector<8x8xf32>
    %42 = vector.broadcast %40 : vector<8x1xf32> to vector<8x8xf32>
    %43 = arith.divf %41, %42 : vector<8x8xf32>
    %44 = vector.extract_strided_slice %11 {offsets = [8, 0], sizes = [8, 32], strides = [1, 1]} : vector<32x32xf32> to vector<8x32xf32>
    %cst_24 = arith.constant dense<0.000000e+00> : vector<8x32xf32>
    %45 = tpu.matmul %43, %44, %cst_24 {dimension_numbers = #tpu.dot_dimension_numbers<[1], [0], [0], [1], [0, 0, 1, 1], [], []>} : vector<8x8xf32>, vector<8x32xf32>, vector<8x32xf32> -> vector<8x32xf32>
    %46 = arith.addf %29, %45 : vector<8x32xf32>
    %47 = vector.extract_strided_slice %10 {offsets = [0, 16], sizes = [8, 8], strides = [1, 1]} : vector<8x32xf32> to vector<8x8xf32>
    %48 = vector.extract_strided_slice %3 {offsets = [0, 16], sizes = [8, 8], strides = [1, 1]} : vector<8x32xf32> to vector<8x8xf32>
    %49 = vector.extract_strided_slice %5 {offsets = [0, 16], sizes = [8, 8], strides = [1, 1]} : vector<8x32xf32> to vector<8x8xf32>
    %cst_25 = arith.constant dense<0.000000e+00> : vector<8x8xf32>
    %50 = tpu.matmul %47, %48, %cst_25 {dimension_numbers = #tpu.dot_dimension_numbers<[1], [1], [0], [0], [0, 0, 1, 0], [], []>} : vector<8x8xf32>, vector<8x8xf32>, vector<8x8xf32> -> vector<8x8xf32>
    %cst_26 = arith.constant dense<0xFF800000> : vector<8xf32>
    %51 = vector.multi_reduction <maximumf>, %50, %cst_26 [1] : vector<8x8xf32> to vector<8xf32>
    %52 = vector.shape_cast %51 : vector<8xf32> to vector<8x1xf32>
    %53 = vector.broadcast %52 : vector<8x1xf32> to vector<8x8xf32>
    %54 = arith.subf %50, %53 : vector<8x8xf32>
    %55 = math.exp %54 : vector<8x8xf32>
    %cst_27 = arith.constant dense<0.000000e+00> : vector<8xf32>
    %56 = vector.multi_reduction <add>, %55, %cst_27 [1] : vector<8x8xf32> to vector<8xf32>
    %57 = vector.shape_cast %56 : vector<8xf32> to vector<8x1xf32>
    %cst_28 = arith.constant dense<0.000000e+00> : vector<8x8xf32>
    %58 = tpu.matmul %55, %49, %cst_28 {dimension_numbers = #tpu.dot_dimension_numbers<[1], [0], [0], [1], [0, 0, 1, 1], [], []>} : vector<8x8xf32>, vector<8x8xf32>, vector<8x8xf32> -> vector<8x8xf32>
    %59 = vector.broadcast %57 : vector<8x1xf32> to vector<8x8xf32>
    %60 = arith.divf %58, %59 : vector<8x8xf32>
    %61 = vector.extract_strided_slice %11 {offsets = [16, 0], sizes = [8, 32], strides = [1, 1]} : vector<32x32xf32> to vector<8x32xf32>
    %cst_29 = arith.constant dense<0.000000e+00> : vector<8x32xf32>
    %62 = tpu.matmul %60, %61, %cst_29 {dimension_numbers = #tpu.dot_dimension_numbers<[1], [0], [0], [1], [0, 0, 1, 1], [], []>} : vector<8x8xf32>, vector<8x32xf32>, vector<8x32xf32> -> vector<8x32xf32>
    %63 = arith.addf %46, %62 : vector<8x32xf32>
    %64 = vector.extract_strided_slice %10 {offsets = [0, 24], sizes = [8, 8], strides = [1, 1]} : vector<8x32xf32> to vector<8x8xf32>
    %65 = vector.extract_strided_slice %3 {offsets = [0, 24], sizes = [8, 8], strides = [1, 1]} : vector<8x32xf32> to vector<8x8xf32>
    %66 = vector.extract_strided_slice %5 {offsets = [0, 24], sizes = [8, 8], strides = [1, 1]} : vector<8x32xf32> to vector<8x8xf32>
    %cst_30 = arith.constant dense<0.000000e+00> : vector<8x8xf32>
    %67 = tpu.matmul %64, %65, %cst_30 {dimension_numbers = #tpu.dot_dimension_numbers<[1], [1], [0], [0], [0, 0, 1, 0], [], []>} : vector<8x8xf32>, vector<8x8xf32>, vector<8x8xf32> -> vector<8x8xf32>
    %cst_31 = arith.constant dense<0xFF800000> : vector<8xf32>
    %68 = vector.multi_reduction <maximumf>, %67, %cst_31 [1] : vector<8x8xf32> to vector<8xf32>
    %69 = vector.shape_cast %68 : vector<8xf32> to vector<8x1xf32>
    %70 = vector.broadcast %69 : vector<8x1xf32> to vector<8x8xf32>
    %71 = arith.subf %67, %70 : vector<8x8xf32>
    %72 = math.exp %71 : vector<8x8xf32>
    %cst_32 = arith.constant dense<0.000000e+00> : vector<8xf32>
    %73 = vector.multi_reduction <add>, %72, %cst_32 [1] : vector<8x8xf32> to vector<8xf32>
    %74 = vector.shape_cast %73 : vector<8xf32> to vector<8x1xf32>
    %cst_33 = arith.constant dense<0.000000e+00> : vector<8x8xf32>
    %75 = tpu.matmul %72, %66, %cst_33 {dimension_numbers = #tpu.dot_dimension_numbers<[1], [0], [0], [1], [0, 0, 1, 1], [], []>} : vector<8x8xf32>, vector<8x8xf32>, vector<8x8xf32> -> vector<8x8xf32>
    %76 = vector.broadcast %74 : vector<8x1xf32> to vector<8x8xf32>
    %77 = arith.divf %75, %76 : vector<8x8xf32>
    %78 = vector.extract_strided_slice %11 {offsets = [24, 0], sizes = [8, 32], strides = [1, 1]} : vector<32x32xf32> to vector<8x32xf32>
    %cst_34 = arith.constant dense<0.000000e+00> : vector<8x32xf32>
    %79 = tpu.matmul %77, %78, %cst_34 {dimension_numbers = #tpu.dot_dimension_numbers<[1], [0], [0], [1], [0, 0, 1, 1], [], []>} : vector<8x8xf32>, vector<8x32xf32>, vector<8x32xf32> -> vector<8x32xf32>
    %80 = arith.addf %63, %79 : vector<8x32xf32>
    %c0_35 = arith.constant 0 : index
    %c0_36 = arith.constant 0 : index
    %81 = vector.load %arg8[%c0_35, %c0_36] : memref<1x32xf32, #tpu.memory_space<vmem>>, vector<1x32xf32>
    %82 = vector.broadcast %81 : vector<1x32xf32> to vector<8x32xf32>
    %83 = arith.addf %80, %82 : vector<8x32xf32>
    %c0_37 = arith.constant 0 : index
    %c0_38 = arith.constant 0 : index
    %c0_39 = arith.constant 0 : index
    %84 = vector.load %arg9[%c0_37, %c0_38, %c0_39] : memref<1x8x32xf32, #tpu.memory_space<vmem>>, vector<1x8x32xf32>
    %85 = vector.shape_cast %84 : vector<1x8x32xf32> to vector<8x32xf32>
    %86 = vector.shape_cast %83 : vector<8x32xf32> to vector<1x8x32xf32>
    tpu.vector_store %arg9[%c0_37, %c0_38, %c0_39], %86 {strides = array<i32>} : memref<1x8x32xf32, #tpu.memory_space<vmem>>, vector<1x8x32xf32>,
    return
  }
  func.func @transform_0(%arg0: i32, %arg1: i32) -> (i32, i32, i32) {
    %c0_i32 = arith.constant 0 : i32
    %c0_i32_0 = arith.constant 0 : i32
    return %arg0, %arg1, %c0_i32 : i32, i32, i32
  }
  func.func @transform_1(%arg0: i32, %arg1: i32) -> (i32, i32, i32) {
    %c0_i32 = arith.constant 0 : i32
    %c0_i32_0 = arith.constant 0 : i32
    %c0_i32_1 = arith.constant 0 : i32
    return %arg0, %c0_i32, %c0_i32_0 : i32, i32, i32
  }
  func.func @transform_2(%arg0: i32, %arg1: i32) -> (i32, i32, i32) {
    %c0_i32 = arith.constant 0 : i32
    %c0_i32_0 = arith.constant 0 : i32
    %c0_i32_1 = arith.constant 0 : i32
    return %arg0, %c0_i32, %c0_i32_0 : i32, i32, i32
  }
  func.func @transform_3(%arg0: i32, %arg1: i32) -> (i32, i32) {
    %c0_i32 = arith.constant 0 : i32
    %c0_i32_0 = arith.constant 0 : i32
    %c0_i32_1 = arith.constant 0 : i32
    return %c0_i32, %c0_i32_0 : i32, i32
  }
  func.func @transform_4(%arg0: i32, %arg1: i32) -> (i32, i32) {
    %c0_i32 = arith.constant 0 : i32
    %c0_i32_0 = arith.constant 0 : i32
    %c0_i32_1 = arith.constant 0 : i32
    return %c0_i32, %c0_i32_0 : i32, i32
  }
  func.func @transform_5(%arg0: i32, %arg1: i32) -> (i32, i32) {
    %c0_i32 = arith.constant 0 : i32
    %c0_i32_0 = arith.constant 0 : i32
    %c0_i32_1 = arith.constant 0 : i32
    return %c0_i32, %c0_i32_0 : i32, i32
  }
  func.func @transform_6(%arg0: i32, %arg1: i32) -> (i32, i32) {
    %c0_i32 = arith.constant 0 : i32
    %c0_i32_0 = arith.constant 0 : i32
    %c0_i32_1 = arith.constant 0 : i32
    return %c0_i32, %c0_i32_0 : i32, i32
  }
  func.func @transform_7(%arg0: i32, %arg1: i32) -> (i32, i32, i32) {
    %c0_i32 = arith.constant 0 : i32
    %c0_i32_0 = arith.constant 0 : i32
    return %arg0, %arg1, %c0_i32 : i32, i32, i32
  }
}

</mosaic_0001>

<llo_original>
// kernel: tpu_custom_call.1
$region0: #{tpu_custom_call.1}
  #allocation0 [shape = 'u32[]', space=smem, size = 0x4, offset = 0x4, fixed_abs, tag = 'smem constant byte address 0x4 - core index']
  #allocation1 [shape = 'u32[144,128]{1,0:T(1,128)}', space=vmem, size = 0x12000, scoped, tag = 'internal scratch']
  %s0 = inlined_call_operand.hbm [shape: f32[2,8,32], index: 0, kind: input, shape index: {}]
  %s1 = inlined_call_operand.hbm [shape: f32[2,8,32], index: 1, kind: input, shape index: {}]
  %s2 = inlined_call_operand.hbm [shape: f32[2,8,32], index: 2, kind: input, shape index: {}]
  %s3 = inlined_call_operand.hbm [shape: f32[32,32], index: 3, kind: input, shape index: {}]
  %s4 = inlined_call_operand.vmem [shape: f32[1,32], index: 4, kind: input, shape index: {}]
  %s5 = inlined_call_operand.hbm [shape: f32[32,32], index: 5, kind: input, shape index: {}]
  %s6 = inlined_call_operand.vmem [shape: f32[1,32], index: 6, kind: input, shape index: {}]
  %s7 = inlined_call_operand.hbm [shape: f32[2,8,32], index: 7, kind: output, shape index: {}]
  %s8 = sld [smem:[#allocation0]]
  $region81: #{tpu_custom_call.1} parent=0
    _
  %s10 = ssub.s32 1, %s8
  %s11 = scalar_select 0, %s10, %s8
  $region1: #{tpu_custom_call.1} parent=0
    #allocation2 [shape = 'u8[8192]{0}', space=vmem, size = 0x2000, scoped, tag = 'input window, operand 0']
    #allocation3 [shape = 's32[2]{0}', space=sflag, size = 0x8, scoped, tag = 'scoped memory for tpu_custom_call.1']
    #allocation4 [shape = 's32[2]{0}', space=sflag, size = 0x8, scoped, tag = 'scoped memory for tpu_custom_call.1']
    #allocation5 [shape = 'u8[8192]{0}', space=vmem, size = 0x2000, scoped, tag = 'input window, operand 1']
    #allocation6 [shape = 's32[2]{0}', space=sflag, size = 0x8, scoped, tag = 'scoped memory for tpu_custom_call.1']
    #allocation7 [shape = 'u8[8192]{0}', space=vmem, size = 0x2000, scoped, tag = 'input window, operand 2']
    #allocation8 [shape = 'u8[16384]{0}', space=vmem, size = 0x4000, scoped, tag = 'input window, operand 3, single buffered']
    #allocation9 [shape = 's32[1]{0}', space=sflag, size = 0x4, scoped, tag = 'scoped memory for tpu_custom_call.1']
    #allocation10 [shape = 'u8[16384]{0}', space=vmem, size = 0x4000, scoped, tag = 'input window, operand 5, single buffered']
    #allocation11 [shape = 'u8[8192]{0}', space=vmem, size = 0x2000, scoped, tag = 'output window, operand 0']
    %12 = vsyncpa [#allocation3], 0
    %s13 = scalar_lea.sflag [#allocation3], 1
    %14 = vsyncpa %s13, 0
    %15 = vsyncpa [#allocation6], 0
    %s16 = scalar_lea.sflag [#allocation6], 1
    %17 = vsyncpa %s16, 0
    %18 = vsyncpa [#allocation9], 0
    %19 = vsyncpa [#allocation4], 0
    %s20 = scalar_lea.sflag [#allocation4], 1
    %21 = vsyncpa %s20, 0
    loop: start=0, step=1, limit=4
    $region2: #{tpu_custom_call.1} parent=1 // loop_pre_header
      _
    $region3: #{tpu_custom_call.1} parent=1 // loop_header
      %s23 = sphi 0, %s27
      %p24 = scmp.ge.s32.totalorder %s23, 4
      %s30 = sphi 0, %s42
      %s31 = sphi 0, %s38
      %s32 = sphi 0, %s30
      %s33 = sphi 0, %s31
      %s34 = sphi 0, %s32
      %s35 = sphi 0, %s33
      %s47 = sphi 0, %s49
      %s50 = sphi 0, %s47
      %s51 = sphi 0, %s50
      %s67 = sphi 0, %s51
      %s73 = sphi 0, %s75
      %s76 = sphi 0, %s73
      %s77 = sphi 0, %s76
      %s93 = sphi 0, %s77
      %s99 = sphi 0, %s101
      %s102 = sphi 0, %s99
      %s103 = sphi 0, %s102
      %s119 = sphi 0, %s103
      %s123 = sphi 0, %s123
      %s125 = sphi 0, %s123
      %s126 = sphi 0, %s125
      %s140 = sphi 0, %s126
      %s144 = sphi 0, %s144
      %s146 = sphi 0, %s144
      %s147 = sphi 0, %s146
      %s161 = sphi 0, %s147
      %s165 = sphi 0, %s165
      %s167 = sphi 0, %s165
      %s168 = sphi 0, %s167
      %s182 = sphi 0, %s168
      %s186 = sphi 0, %s186
      %s188 = sphi 0, %s186
      %s189 = sphi 0, %s188
      %s203 = sphi 0, %s189
      %s211 = sphi 0, %s213
      %s214 = sphi 0, %s211
      %s215 = sphi 0, %s214
      %s231 = sphi 0, %s215
    $region4: #{tpu_custom_call.1} parent=1 // loop_header_branch
      %26 = sbr.rel (%p24) target = $region8
    $region5: #{tpu_custom_call.1} parent=1 // loop_body
      %s28 = ssub.s32 %s23, 1
      %s29 = ssub.s32 %s23, 2
      %s36 = sadd.s32 1, %s31
      %p37 = scmp.ge.s32.totalorder %s36, 1
      %s38 = scalar_select %p37, 0, %s36
      %s39 = sadd.s32 1, %s30
      %s40 = scalar_select %p37, %s39, %s30
      %p41 = scmp.ge.s32.totalorder %s40, 2
      %s42 = scalar_select %p41, 0, %s40
      %s43 = ssub.s32 %s30, %s42
      %s44 = ssub.s32 %s31, %s38
      %s45 = sor.u32 %s43, %s44
      %p46 = scmp.eq.s32.totalorder %s45, 0
      %s48 = sadd.s32 %s47, 1
      %s49 = scalar_select %p46, %s47, %s48
      %p52 = pneg %p46
      %p53 = scmp.eq.s32.totalorder %s23, 1
      %p54 = por %p52, %p53
      %p55 = scmp.ne.s32.totalorder %s47, %s50
      %p56 = scmp.eq.s32.totalorder %s23, 0
      %p57 = por %p55, %p56
      %p58 = scmp.ne.s32.totalorder %s47, %s50
      %p59 = scmp.eq.s32.totalorder %s28, 1
      %p60 = por %p58, %p59
      %p61 = scmp.ne.s32.totalorder %s50, %s51
      %p62 = scmp.eq.s32.totalorder %s28, 0
      %p63 = por %p61, %p62
      %p64 = scmp.ne.s32.totalorder %s50, %s51
      %p65 = scmp.eq.s32.totalorder %s29, 1
      %p66 = por %p64, %p65
      %p68 = scmp.ne.s32.totalorder %s51, %s67
      %p69 = scmp.eq.s32.totalorder %s29, 0
      %p70 = por %p68, %p69
      %s71 = ssub.s32 %s30, %s42
      %p72 = scmp.eq.s32.totalorder %s71, 0
      %s74 = sadd.s32 %s73, 1
      %s75 = scalar_select %p72, %s73, %s74
      %p78 = pneg %p72
      %p79 = scmp.eq.s32.totalorder %s23, 1
      %p80 = por %p78, %p79
      %p81 = scmp.ne.s32.totalorder %s73, %s76
      %p82 = scmp.eq.s32.totalorder %s23, 0
      %p83 = por %p81, %p82
      %p84 = scmp.ne.s32.totalorder %s73, %s76
      %p85 = scmp.eq.s32.totalorder %s28, 1
      %p86 = por %p84, %p85
      %p87 = scmp.ne.s32.totalorder %s76, %s77
      %p88 = scmp.eq.s32.totalorder %s28, 0
      %p89 = por %p87, %p88
      %p90 = scmp.ne.s32.totalorder %s76, %s77
      %p91 = scmp.eq.s32.totalorder %s29, 1
      %p92 = por %p90, %p91
      %p94 = scmp.ne.s32.totalorder %s77, %s93
      %p95 = scmp.eq.s32.totalorder %s29, 0
      %p96 = por %p94, %p95
      %s97 = ssub.s32 %s30, %s42
      %p98 = scmp.eq.s32.totalorder %s97, 0
      %s100 = sadd.s32 %s99, 1
      %s101 = scalar_select %p98, %s99, %s100
      %p104 = pneg %p98
      %p105 = scmp.eq.s32.totalorder %s23, 1
      %p106 = por %p104, %p105
      %p107 = scmp.ne.s32.totalorder %s99, %s102
      %p108 = scmp.eq.s32.totalorder %s23, 0
      %p109 = por %p107, %p108
      %p110 = scmp.ne.s32.totalorder %s99, %s102
      %p111 = scmp.eq.s32.totalorder %s28, 1
      %p112 = por %p110, %p111
      %p113 = scmp.ne.s32.totalorder %s102, %s103
      %p114 = scmp.eq.s32.totalorder %s28, 0
      %p115 = por %p113, %p114
      %p116 = scmp.ne.s32.totalorder %s102, %s103
      %p117 = scmp.eq.s32.totalorder %s29, 1
      %p118 = por %p116, %p117
      %p120 = scmp.ne.s32.totalorder %s103, %s119
      %p121 = scmp.eq.s32.totalorder %s29, 0
      %p122 = por %p120, %p121
      %s124 = sadd.s32 %s123, 1
      %p127 = scmp.eq.s32.totalorder %s23, 1
      %p128 = scmp.ne.s32.totalorder %s123, %s125
      %p129 = scmp.eq.s32.totalorder %s23, 0
      %p130 = por %p128, %p129
      %p131 = scmp.ne.s32.totalorder %s123, %s125
      %p132 = scmp.eq.s32.totalorder %s28, 1
      %p133 = por %p131, %p132
      %p134 = scmp.ne.s32.totalorder %s125, %s126
      %p135 = scmp.eq.s32.totalorder %s28, 0
      %p136 = por %p134, %p135
      %p137 = scmp.ne.s32.totalorder %s125, %s126
      %p138 = scmp.eq.s32.totalorder %s29, 1
      %p139 = por %p137, %p138
      %p141 = scmp.ne.s32.totalorder %s126, %s140
      %p142 = scmp.eq.s32.totalorder %s29, 0
      %p143 = por %p141, %p142
      %s145 = sadd.s32 %s144, 1
      %p148 = scmp.eq.s32.totalorder %s23, 1
      %p149 = scmp.ne.s32.totalorder %s144, %s146
      %p150 = scmp.eq.s32.totalorder %s23, 0
      %p151 = por %p149, %p150
      %p152 = scmp.ne.s32.totalorder %s144, %s146
      %p153 = scmp.eq.s32.totalorder %s28, 1
      %p154 = por %p152, %p153
      %p155 = scmp.ne.s32.totalorder %s146, %s147
      %p156 = scmp.eq.s32.totalorder %s28, 0
      %p157 = por %p155, %p156
      %p158 = scmp.ne.s32.totalorder %s146, %s147
      %p159 = scmp.eq.s32.totalorder %s29, 1
      %p160 = por %p158, %p159
      %p162 = scmp.ne.s32.totalorder %s147, %s161
      %p163 = scmp.eq.s32.totalorder %s29, 0
      %p164 = por %p162, %p163
      %s166 = sadd.s32 %s165, 1
      %p169 = scmp.eq.s32.totalorder %s23, 1
      %p170 = scmp.ne.s32.totalorder %s165, %s167
      %p171 = scmp.eq.s32.totalorder %s23, 0
      %p172 = por %p170, %p171
      %p173 = scmp.ne.s32.totalorder %s165, %s167
      %p174 = scmp.eq.s32.totalorder %s28, 1
      %p175 = por %p173, %p174
      %p176 = scmp.ne.s32.totalorder %s167, %s168
      %p177 = scmp.eq.s32.totalorder %s28, 0
      %p178 = por %p176, %p177
      %p179 = scmp.ne.s32.totalorder %s167, %s168
      %p180 = scmp.eq.s32.totalorder %s29, 1
      %p181 = por %p179, %p180
      %p183 = scmp.ne.s32.totalorder %s168, %s182
      %p184 = scmp.eq.s32.totalorder %s29, 0
      %p185 = por %p183, %p184
      %s187 = sadd.s32 %s186, 1
      %p190 = scmp.eq.s32.totalorder %s23, 1
      %p191 = scmp.ne.s32.totalorder %s186, %s188
      %p192 = scmp.eq.s32.totalorder %s23, 0
      %p193 = por %p191, %p192
      %p194 = scmp.ne.s32.totalorder %s186, %s188
      %p195 = scmp.eq.s32.totalorder %s28, 1
      %p196 = por %p194, %p195
      %p197 = scmp.ne.s32.totalorder %s188, %s189
      %p198 = scmp.eq.s32.totalorder %s28, 0
      %p199 = por %p197, %p198
      %p200 = scmp.ne.s32.totalorder %s188, %s189
      %p201 = scmp.eq.s32.totalorder %s29, 1
      %p202 = por %p200, %p201
      %p204 = scmp.ne.s32.totalorder %s189, %s203
      %p205 = scmp.eq.s32.totalorder %s29, 0
      %p206 = por %p204, %p205
      %s207 = ssub.s32 %s30, %s42
      %s208 = ssub.s32 %s31, %s38
      %s209 = sor.u32 %s207, %s208
      %p210 = scmp.eq.s32.totalorder %s209, 0
      %s212 = sadd.s32 %s211, 1
      %s213 = scalar_select %p210, %s211, %s212
      %p216 = pneg %p210
      %p217 = scmp.eq.s32.totalorder %s23, 1
      %p218 = por %p216, %p217
      %p219 = scmp.ne.s32.totalorder %s211, %s214
      %p220 = scmp.eq.s32.totalorder %s23, 0
      %p221 = por %p219, %p220
      %p222 = scmp.ne.s32.totalorder %s211, %s214
      %p223 = scmp.eq.s32.totalorder %s28, 1
      %p224 = por %p222, %p223
      %p225 = scmp.ne.s32.totalorder %s214, %s215
      %p226 = scmp.eq.s32.totalorder %s28, 0
      %p227 = por %p225, %p226
      %p228 = scmp.ne.s32.totalorder %s214, %s215
      %p229 = scmp.eq.s32.totalorder %s29, 1
      %p230 = por %p228, %p229
      %p232 = scmp.ne.s32.totalorder %s215, %s231
      %p233 = scmp.eq.s32.totalorder %s29, 0
      %p234 = por %p232, %p233
      %p235 = scmp.le.s32.totalorder 1, %s23
      %p236 = scmp.lt.s32.totalorder %s23, 3
      %p237 = pnand %p235, %p236
      %p238 = pneg %p237
      // Predicated region
      $region9: #{tpu_custom_call.1} parent=5 // pred_check
        _
      $region10: #{tpu_custom_call.1} parent=5 // pred_check_branch
        %240 = sbr.rel (%p237) target = $region12
      $region11: #{tpu_custom_call.1} parent=5 // pred_region
        %s241 = ssub.s32 %s23, 1
        // Predicated region
        $region13: #{tpu_custom_call.1} parent=11 // pred_check
          %p242 = pneg %p136
        $region14: #{tpu_custom_call.1} parent=11 // pred_check_branch
          %244 = sbr.rel (%p242) target = $region16
        $region15: #{tpu_custom_call.1} parent=11 // pred_region
          %s246 = ssub.s32 512, 512
          %247 = vsyncadd [#allocation9], %s246
          %s248 = sshll.u32 [#allocation8], 4
          %s249 = int_to_ptr.vmem [resolvable:$true] %s248
          %254 = dma.hbm_to_vmem [thread:$0]  %s3, 512, %s249, [#allocation9], 128, 128, 8
        $region16: #{tpu_custom_call.1} parent=11 // pred_fallthru
          _
        // Predicated region
        $region17: #{tpu_custom_call.1} parent=11 // pred_check
          %p255 = pneg %p157
        $region18: #{tpu_custom_call.1} parent=11 // pred_check_branch
          %257 = sbr.rel (%p255) target = $region20
        $region19: #{tpu_custom_call.1} parent=11 // pred_region
          _
        $region20: #{tpu_custom_call.1} parent=11 // pred_fallthru
          _
        // Predicated region
        $region21: #{tpu_custom_call.1} parent=11 // pred_check
          %p258 = pneg %p178
        $region22: #{tpu_custom_call.1} parent=11 // pred_check_branch
          %260 = sbr.rel (%p258) target = $region24
        $region23: #{tpu_custom_call.1} parent=11 // pred_region
          %s262 = ssub.s32 512, 512
          %263 = vsyncadd [#allocation9], %s262
          %s264 = sshll.u32 [#allocation10], 4
          %s265 = int_to_ptr.vmem [resolvable:$true] %s264
          %270 = dma.hbm_to_vmem [thread:$0]  %s5, 512, %s265, [#allocation9], 128, 128, 8
        $region24: #{tpu_custom_call.1} parent=11 // pred_fallthru
          _
        // Predicated region
        $region25: #{tpu_custom_call.1} parent=11 // pred_check
          %p271 = pneg %p199
        $region26: #{tpu_custom_call.1} parent=11 // pred_check_branch
          %273 = sbr.rel (%p271) target = $region28
        $region27: #{tpu_custom_call.1} parent=11 // pred_region
          _
        $region28: #{tpu_custom_call.1} parent=11 // pred_fallthru
          _
      $region12: #{tpu_custom_call.1} parent=5 // pred_fallthru
        _
      %p274 = scmp.lt.s32.totalorder %s23, 2
      // Predicated region
      $region29: #{tpu_custom_call.1} parent=5 // pred_check
        %p275 = pneg %p274
      $region30: #{tpu_custom_call.1} parent=5 // pred_check_branch
        %277 = sbr.rel (%p275) target = $region32
      $region31: #{tpu_custom_call.1} parent=5 // pred_region
        // Predicated region
        $region33: #{tpu_custom_call.1} parent=31 // pred_check
          %p278 = pneg %p57
        $region34: #{tpu_custom_call.1} parent=31 // pred_check_branch
          %280 = sbr.rel (%p278) target = $region36
        $region35: #{tpu_custom_call.1} parent=31 // pred_region
          %s281 = sand.u32 %s47, 1
          %s282 = scalar_lea.sflag [#allocation3], %s281
          %s283 = sand.u32 %s47, 1
          %s284 = smul.addr %s283, 8
          %s285 = scalar_lea.vmem [#allocation2], %s284
          %s287 = ssub.s32 128, 128
          %288 = vsyncadd %s282, %s287
          %s289 = sadd.s32 %s31, %s30
          %s290 = smul.addr %s289, 128
          %s291 = scalar_lea.hbm %s0, %s290
          %s293 = sshll.u32 %s285, 4
          %s294 = int_to_ptr.vmem [resolvable:$true] %s293
          %296 = dma.hbm_to_vmem [thread:$0]  %s291, 128, %s294, %s282
        $region36: #{tpu_custom_call.1} parent=31 // pred_fallthru
          _
        // Predicated region
        $region37: #{tpu_custom_call.1} parent=31 // pred_check
          %p297 = pneg %p83
        $region38: #{tpu_custom_call.1} parent=31 // pred_check_branch
          %299 = sbr.rel (%p297) target = $region40
        $region39: #{tpu_custom_call.1} parent=31 // pred_region
          %s300 = sand.u32 %s23, 1
          %s301 = scalar_lea.sflag [#allocation6], %s300
          %s302 = sand.u32 %s73, 1
          %s303 = smul.addr %s302, 8
          %s304 = scalar_lea.vmem [#allocation5], %s303
          %s306 = ssub.s32 128, 128
          %307 = vsyncadd %s301, %s306
          %s308 = smul.addr %s30, 128
          %s309 = scalar_lea.hbm %s1, %s308
          %s311 = sshll.u32 %s304, 4
          %s312 = int_to_ptr.vmem [resolvable:$true] %s311
          %314 = dma.hbm_to_vmem [thread:$0]  %s309, 128, %s312, %s301
        $region40: #{tpu_custom_call.1} parent=31 // pred_fallthru
          _
        // Predicated region
        $region41: #{tpu_custom_call.1} parent=31 // pred_check
          %p315 = pneg %p109
        $region42: #{tpu_custom_call.1} parent=31 // pred_check_branch
          %317 = sbr.rel (%p315) target = $region44
        $region43: #{tpu_custom_call.1} parent=31 // pred_region
          %s318 = sand.u32 %s23, 1
          %s319 = scalar_lea.sflag [#allocation6], %s318
          %s320 = sand.u32 %s99, 1
          %s321 = smul.addr %s320, 8
          %s322 = scalar_lea.vmem [#allocation7], %s321
          %s324 = ssub.s32 128, 128
          %325 = vsyncadd %s319, %s324
          %s326 = smul.addr %s30, 128
          %s327 = scalar_lea.hbm %s2, %s326
          %s329 = sshll.u32 %s322, 4
          %s330 = int_to_ptr.vmem [resolvable:$true] %s329
          %332 = dma.hbm_to_vmem [thread:$0]  %s327, 128, %s330, %s319
        $region44: #{tpu_custom_call.1} parent=31 // pred_fallthru
          _
      $region32: #{tpu_custom_call.1} parent=5 // pred_fallthru
        _
      %p333 = scmp.le.s32.totalorder 1, %s23
      %p334 = scmp.lt.s32.totalorder %s23, 3
      %p335 = pnand %p333, %p334
      %p336 = pneg %p335
      // Predicated region
      $region45: #{tpu_custom_call.1} parent=5 // pred_check
        _
      $region46: #{tpu_custom_call.1} parent=5 // pred_check_branch
        %338 = sbr.rel (%p335) target = $region48
      $region47: #{tpu_custom_call.1} parent=5 // pred_region
        %s339 = ssub.s32 %s23, 1
        %s340 = sand.u32 %s50, 1
        %s341 = scalar_lea.sflag [#allocation3], %s340
        %s342 = sand.u32 %s50, 1
        %s343 = smul.addr %s342, 8
        %s344 = scalar_lea.vmem [#allocation2], %s343
        // Predicated region
        $region49: #{tpu_custom_call.1} parent=47 // pred_check
          %p345 = pneg %p63
        $region50: #{tpu_custom_call.1} parent=47 // pred_check_branch
          %347 = sbr.rel (%p345) target = $region52
        $region51: #{tpu_custom_call.1} parent=47 // pred_region
          %348 = dma.done %s341, 128
        $region52: #{tpu_custom_call.1} parent=47 // pred_fallthru
          _
        %s349 = sand.u32 %s28, 1
        %s350 = scalar_lea.sflag [#allocation6], %s349
        %s351 = sand.u32 %s76, 1
        %s352 = smul.addr %s351, 8
        %s353 = scalar_lea.vmem [#allocation5], %s352
        // Predicated region
        $region53: #{tpu_custom_call.1} parent=47 // pred_check
          %p354 = pneg %p89
        $region54: #{tpu_custom_call.1} parent=47 // pred_check_branch
          %356 = sbr.rel (%p354) target = $region56
        $region55: #{tpu_custom_call.1} parent=47 // pred_region
          %357 = dma.done %s350, 128
        $region56: #{tpu_custom_call.1} parent=47 // pred_fallthru
          _
        %s358 = sand.u32 %s28, 1
        %s359 = scalar_lea.sflag [#allocation6], %s358
        %s360 = sand.u32 %s102, 1
        %s361 = smul.addr %s360, 8
        %s362 = scalar_lea.vmem [#allocation7], %s361
        // Predicated region
        $region57: #{tpu_custom_call.1} parent=47 // pred_check
          %p363 = pneg %p115
        $region58: #{tpu_custom_call.1} parent=47 // pred_check_branch
          %365 = sbr.rel (%p363) target = $region60
        $region59: #{tpu_custom_call.1} parent=47 // pred_region
          %366 = dma.done %s359, 128
        $region60: #{tpu_custom_call.1} parent=47 // pred_fallthru
          _
        // Predicated region
        $region61: #{tpu_custom_call.1} parent=47 // pred_check
          %p367 = pneg %p136
        $region62: #{tpu_custom_call.1} parent=47 // pred_check_branch
          %369 = sbr.rel (%p367) target = $region64
        $region63: #{tpu_custom_call.1} parent=47 // pred_region
          %370 = dma.done [#allocation9], 512
        $region64: #{tpu_custom_call.1} parent=47 // pred_fallthru
          _
        // Predicated region
        $region65: #{tpu_custom_call.1} parent=47 // pred_check
          %p371 = pneg %p178
        $region66: #{tpu_custom_call.1} parent=47 // pred_check_branch
          %373 = sbr.rel (%p371) target = $region68
        $region67: #{tpu_custom_call.1} parent=47 // pred_region
          %374 = dma.done [#allocation9], 512
        $region68: #{tpu_custom_call.1} parent=47 // pred_fallthru
          _
        %s375 = sand.u32 %s50, 1
        %s376 = scalar_lea.sflag [#allocation3], %s375
        %s377 = sand.u32 %s50, 1
        %s378 = smul.addr %s377, 8
        %s379 = scalar_lea.vmem [#allocation2], %s378
        %p380 = pneg %p63
        %p381 = pneg %p60
        %s382 = sand.u32 %s28, 1
        %s383 = scalar_lea.sflag [#allocation6], %s382
        %s384 = sand.u32 %s76, 1
        %s385 = smul.addr %s384, 8
        %s386 = scalar_lea.vmem [#allocation5], %s385
        %p387 = pneg %p89
        %p388 = pneg %p86
        %s389 = sand.u32 %s28, 1
        %s390 = scalar_lea.sflag [#allocation6], %s389
        %s391 = sand.u32 %s102, 1
        %s392 = smul.addr %s391, 8
        %s393 = scalar_lea.vmem [#allocation7], %s392
        %p394 = pneg %p115
        %p395 = pneg %p112
        %p396 = pneg %p136
        %p397 = pneg %p133
        %p398 = pneg %p157
        %p399 = pneg %p154
        %p400 = pneg %p178
        %p401 = pneg %p175
        %p402 = pneg %p199
        %p403 = pneg %p196
        %p404 = pneg %p227
        %p405 = pneg %p224
        %s406 = sand.u32 %s214, 1
        %s407 = scalar_lea.sflag [#allocation4], %s406
        %s408 = sand.u32 %s214, 1
        %s409 = smul.addr %s408, 8
        %s410 = scalar_lea.vmem [#allocation11], %s409
        %v411 = vld [vmem:[%s344] sm:$0xff]
        %v412 = vld [vmem:[%s353] sm:$0xff]
        %v413 = vld [vmem:[%s362] sm:$0xff]
        %v414 = vld [vmem:[#allocation8] sm:$0xff]
        %v415 = vld [vmem:[#allocation8 + $0x8] sm:$0xff]
        %v416 = vld [vmem:[#allocation8 + $0x10] sm:$0xff]
        %v417 = vld [vmem:[#allocation8 + $0x18] sm:$0xff]
        %v418 = vld [vmem:[%s4] sm:$0x1]
        %v420 = vlaneseq
        %v421 = vshrl.u32 %v420, 7
        %v422 = vsub.s32 0, %v421
        %v423 = vrot.slane %v418, %v422
        %vm425 = vcmask 261120
        %v427 = vsel %vm425, %v411, 0
        %429 = vmatprep.subr.mxu0 0.0
        %430 = vmatpush1.msra.mxu0 %v414
        %431 = vmatprep.subr.mxu0 0.0
        %432 = vmatpush1.msra.mxu0 %v415
        %433 = vmatprep.subr.mxu0 0.0
        %434 = vmatpush1.msra.mxu0 %v416
        %435 = vmatprep.subr.mxu0 0.0
        %436 = vmatpush1.msra.mxu0 %v417
        %437 = vmatprep.subr.mxu0 0.0
        %438 = vmatpush1.msra.mxu0 0.0
        %439 = vmatprep.subr.mxu0 0.0
        %440 = vmatpush1.msra.mxu0 0.0
        %441 = vmatprep.subr.mxu0 0.0
        %442 = vmatpush1.msra.mxu0 0.0
        %443 = vmatprep.subr.mxu0 0.0
        %444 = vmatpush1.msra.mxu0 0.0
        %445 = vmatprep.subr.mxu0 0.0
        %446 = vmatpush1.msra.mxu0 0.0
        %447 = vmatprep.subr.mxu0 0.0
        %448 = vmatpush1.msra.mxu0 0.0
        %449 = vmatprep.subr.mxu0 0.0
        %450 = vmatpush1.msra.mxu0 0.0
        %451 = vmatprep.subr.mxu0 0.0
        %452 = vmatpush1.msra.mxu0 0.0
        %453 = vmatprep.subr.mxu0 0.0
        %454 = vmatpush1.msra.mxu0 0.0
        %455 = vmatprep.subr.mxu0 0.0
        %456 = vmatpush1.msra.mxu0 0.0
        %457 = vmatprep.subr.mxu0 0.0
        %458 = vmatpush1.msra.mxu0 0.0
        %459 = vmatprep.subr.mxu0 0.0
        %460 = vmatpush1.msra.mxu0 0.0
        %461 = vmatprep.subr.mxu0 0.0
        %462 = vmatpush1.msra.mxu0 0.0
        %463 = vmatprep.subr.mxu0 0.0
        %464 = vmatpush1.msra.mxu0 0.0
        %465 = vmatprep.subr.mxu0 0.0
        %466 = vmatpush1.msra.mxu0 0.0
        %467 = vmatprep.subr.mxu0 0.0
        %468 = vmatpush1.msra.mxu0 0.0
        %469 = vmatprep.subr.mxu0 0.0
        %470 = vmatpush1.msra.mxu0 0.0
        %471 = vmatprep.subr.mxu0 0.0
        %472 = vmatpush1.msra.mxu0 0.0
        %473 = vmatprep.subr.mxu0 0.0
        %474 = vmatpush1.msra.mxu0 0.0
        %475 = vmatprep.subr.mxu0 0.0
        %476 = vmatpush1.msra.mxu0 0.0
        %477 = vmatprep.subr.mxu0 0.0
        %478 = vmatpush1.msra.mxu0 0.0
        %479 = vmatprep.subr.mxu0 0.0
        %480 = vmatpush1.msra.mxu0 0.0
        %481 = vmatprep.subr.mxu0 0.0
        %482 = vmatpush1.msra.mxu0 0.0
        %483 = vmatprep.subr.mxu0 0.0
        %484 = vmatpush1.msra.mxu0 0.0
        %485 = vmatprep.subr.mxu0 0.0
        %486 = vmatpush1.msra.mxu0 0.0
        %487 = vmatprep.subr.mxu0 0.0
        %488 = vmatpush1.msra.mxu0 0.0
        %489 = vmatprep.subr.mxu0 0.0
        %490 = vmatpush1.msra.mxu0 0.0
        %491 = vmatprep.subr.mxu0 0.0
        %492 = vmatpush1.msra.mxu0 0.0
        %493 = vmatprep.mubr.f32.mxu0 0.0
        %494 = vmatmul.mubr.f32.gmra.mrb[0].mxu0 %v427
        %v495 = vpop.f32.mrb[0].mxu0
        %v496 = vadd.f32 %v423, %v495
        %v497 = vpop.f32.mrb[0].mxu0
        %498 = vdwg.mxu0
        %v499 = vld [vmem:[#allocation10] sm:$0xff]
        %v500 = vld [vmem:[#allocation10 + $0x8] sm:$0xff]
        %v501 = vld [vmem:[#allocation10 + $0x10] sm:$0xff]
        %v502 = vld [vmem:[#allocation10 + $0x18] sm:$0xff]
        %vm503 = vcmask 64512
        %v505 = vsel %vm503, %v496, 0
        %v508 = vsel %vm503, %v412, 0
        %510 = vmatprep.subr.mxu0 0.0
        %511 = vmatpush1.xpose.msra.mxu0 %v508
        %512 = vmatprep.subr.mxu0 0.0
        %513 = vmatpush1.xpose.msra.mxu0 0.0
        %514 = vmatprep.subr.mxu0 0.0
        %515 = vmatpush1.xpose.msra.mxu0 0.0
        %516 = vmatprep.subr.mxu0 0.0
        %517 = vmatpush1.xpose.msra.mxu0 0.0
        %518 = vmatprep.subr.mxu0 0.0
        %519 = vmatpush1.xpose.msra.mxu0 0.0
        %520 = vmatprep.subr.mxu0 0.0
        %521 = vmatpush1.xpose.msra.mxu0 0.0
        %522 = vmatprep.subr.mxu0 0.0
        %523 = vmatpush1.xpose.msra.mxu0 0.0
        %524 = vmatprep.subr.mxu0 0.0
        %525 = vmatpush1.xpose.msra.mxu0 0.0
        %526 = vmatprep.subr.mxu0 0.0
        %527 = vmatpush1.xpose.msra.mxu0 0.0
        %528 = vmatprep.subr.mxu0 0.0
        %529 = vmatpush1.xpose.msra.mxu0 0.0
        %530 = vmatprep.subr.mxu0 0.0
        %531 = vmatpush1.xpose.msra.mxu0 0.0
        %532 = vmatprep.subr.mxu0 0.0
        %533 = vmatpush1.xpose.msra.mxu0 0.0
        %534 = vmatprep.subr.mxu0 0.0
        %535 = vmatpush1.xpose.msra.mxu0 0.0
        %536 = vmatprep.subr.mxu0 0.0
        %537 = vmatpush1.xpose.msra.mxu0 0.0
        %538 = vmatprep.subr.mxu0 0.0
        %539 = vmatpush1.xpose.msra.mxu0 0.0
        %540 = vmatprep.subr.mxu0 0.0
        %541 = vmatpush1.xpose.msra.mxu0 0.0
        %542 = vmatprep.subr.mxu0 0.0
        %543 = vmatpush1.xpose.msra.mxu0 0.0
        %544 = vmatprep.subr.mxu0 0.0
        %545 = vmatpush1.xpose.msra.mxu0 0.0
        %546 = vmatprep.subr.mxu0 0.0
        %547 = vmatpush1.xpose.msra.mxu0 0.0
        %548 = vmatprep.subr.mxu0 0.0
        %549 = vmatpush1.xpose.msra.mxu0 0.0
        %550 = vmatprep.subr.mxu0 0.0
        %551 = vmatpush1.xpose.msra.mxu0 0.0
        %552 = vmatprep.subr.mxu0 0.0
        %553 = vmatpush1.xpose.msra.mxu0 0.0
        %554 = vmatprep.subr.mxu0 0.0
        %555 = vmatpush1.xpose.msra.mxu0 0.0
        %556 = vmatprep.subr.mxu0 0.0
        %557 = vmatpush1.xpose.msra.mxu0 0.0
        %558 = vmatprep.subr.mxu0 0.0
        %559 = vmatpush1.xpose.msra.mxu0 0.0
        %560 = vmatprep.subr.mxu0 0.0
        %561 = vmatpush1.xpose.msra.mxu0 0.0
        %562 = vmatprep.subr.mxu0 0.0
        %563 = vmatpush1.xpose.msra.mxu0 0.0
        %564 = vmatprep.subr.mxu0 0.0
        %565 = vmatpush1.xpose.msra.mxu0 0.0
        %566 = vmatprep.subr.mxu0 0.0
        %567 = vmatpush1.xpose.msra.mxu0 0.0
        %568 = vmatprep.subr.mxu0 0.0
        %569 = vmatpush1.xpose.msra.mxu0 0.0
        %570 = vmatprep.subr.mxu0 0.0
        %571 = vmatpush1.xpose.msra.mxu0 0.0
        %572 = vmatprep.subr.mxu0 0.0
        %573 = vmatpush1.xpose.msra.mxu0 0.0
        %574 = vmatprep.mubr.f32.mxu0 0.0
        %575 = vmatmul.mubr.f32.gmra.mrb[0].mxu0 %v505
        %v576 = vpop.f32.mrb[0].mxu0
        %v577 = vadd.f32 0.0, %v576
        %v578 = vpop.f32.mrb[0].mxu0
        %579 = vdwg.mxu0
        %v580 = vsel %vm503, %v577, -inf
        %581 = vmax.xlane.f32.xlu0 %v580
        %v582 = vpop.xlane.xlu0 %581
        %v583 = vsub.f32 %v577, %v582
        %v584 = vmul.f32 %v583, 1.442695
        %v585 = vpow.pop %v584
        %v586 = vsel %vm503, %v585, 0.0
        %587 = vadd.xlane.f32.xlu0 %v586
        %v588 = vpop.xlane.xlu0 %587
        %v590 = vsel %vm503, %v585, 0
        %592 = vmatprep.subr.mxu0 0.0
        %593 = vmatpush1.msra.mxu0 %v413
        %594 = vmatprep.subr.mxu0 0.0
        %595 = vmatpush1.msra.mxu0 0.0
        %596 = vmatprep.subr.mxu0 0.0
        %597 = vmatpush1.msra.mxu0 0.0
        %598 = vmatprep.subr.mxu0 0.0
        %599 = vmatpush1.msra.mxu0 0.0
        %600 = vmatprep.subr.mxu0 0.0
        %601 = vmatpush1.msra.mxu0 0.0
        %602 = vmatprep.subr.mxu0 0.0
        %603 = vmatpush1.msra.mxu0 0.0
        %604 = vmatprep.subr.mxu0 0.0
        %605 = vmatpush1.msra.mxu0 0.0
        %606 = vmatprep.subr.mxu0 0.0
        %607 = vmatpush1.msra.mxu0 0.0
        %608 = vmatprep.subr.mxu0 0.0
        %609 = vmatpush1.msra.mxu0 0.0
        %610 = vmatprep.subr.mxu0 0.0
        %611 = vmatpush1.msra.mxu0 0.0
        %612 = vmatprep.subr.mxu0 0.0
        %613 = vmatpush1.msra.mxu0 0.0
        %614 = vmatprep.subr.mxu0 0.0
        %615 = vmatpush1.msra.mxu0 0.0
        %616 = vmatprep.subr.mxu0 0.0
        %617 = vmatpush1.msra.mxu0 0.0
        %618 = vmatprep.subr.mxu0 0.0
        %619 = vmatpush1.msra.mxu0 0.0
        %620 = vmatprep.subr.mxu0 0.0
        %621 = vmatpush1.msra.mxu0 0.0
        %622 = vmatprep.subr.mxu0 0.0
        %623 = vmatpush1.msra.mxu0 0.0
        %624 = vmatprep.subr.mxu0 0.0
        %625 = vmatpush1.msra.mxu0 0.0
        %626 = vmatprep.subr.mxu0 0.0
        %627 = vmatpush1.msra.mxu0 0.0
        %628 = vmatprep.subr.mxu0 0.0
        %629 = vmatpush1.msra.mxu0 0.0
        %630 = vmatprep.subr.mxu0 0.0
        %631 = vmatpush1.msra.mxu0 0.0
        %632 = vmatprep.subr.mxu0 0.0
        %633 = vmatpush1.msra.mxu0 0.0
        %634 = vmatprep.subr.mxu0 0.0
        %635 = vmatpush1.msra.mxu0 0.0
        %636 = vmatprep.subr.mxu0 0.0
        %637 = vmatpush1.msra.mxu0 0.0
        %638 = vmatprep.subr.mxu0 0.0
        %639 = vmatpush1.msra.mxu0 0.0
        %640 = vmatprep.subr.mxu0 0.0
        %641 = vmatpush1.msra.mxu0 0.0
        %642 = vmatprep.subr.mxu0 0.0
        %643 = vmatpush1.msra.mxu0 0.0
        %644 = vmatprep.subr.mxu0 0.0
        %645 = vmatpush1.msra.mxu0 0.0
        %646 = vmatprep.subr.mxu0 0.0
        %647 = vmatpush1.msra.mxu0 0.0
        %648 = vmatprep.subr.mxu0 0.0
        %649 = vmatpush1.msra.mxu0 0.0
        %650 = vmatprep.subr.mxu0 0.0
        %651 = vmatpush1.msra.mxu0 0.0
        %652 = vmatprep.subr.mxu0 0.0
        %653 = vmatpush1.msra.mxu0 0.0
        %654 = vmatprep.subr.mxu0 0.0
        %655 = vmatpush1.msra.mxu0 0.0
        %656 = vmatprep.mubr.f32.mxu0 0.0
        %657 = vmatmul.mubr.f32.gmra.mrb[0].mxu0 %v590
        %v658 = vpop.f32.mrb[0].mxu0
        %v659 = vadd.f32 0.0, %v658
        %v660 = vpop.f32.mrb[0].mxu0
        %661 = vdwg.mxu0
        %v662 = vrcp.pop %v588
        %v663 = vmul.f32 %v659, %v662
        %664 = vrot.lane.b32.xlu0 %v496, 120
        %v665 = vpop.permute.xlu0 %664
        %666 = vrot.lane.b32.xlu0 %v412, 120
        %v667 = vpop.permute.xlu0 %666
        %v668 = vsel %vm503, %v665, 0
        %v670 = vsel %vm503, %v667, 0
        %672 = vmatprep.subr.mxu0 0.0
        %673 = vmatpush1.xpose.msra.mxu0 %v670
        %674 = vmatprep.subr.mxu0 0.0
        %675 = vmatpush1.xpose.msra.mxu0 0.0
        %676 = vmatprep.subr.mxu0 0.0
        %677 = vmatpush1.xpose.msra.mxu0 0.0
        %678 = vmatprep.subr.mxu0 0.0
        %679 = vmatpush1.xpose.msra.mxu0 0.0
        %680 = vmatprep.subr.mxu0 0.0
        %681 = vmatpush1.xpose.msra.mxu0 0.0
        %682 = vmatprep.subr.mxu0 0.0
        %683 = vmatpush1.xpose.msra.mxu0 0.0
        %684 = vmatprep.subr.mxu0 0.0
        %685 = vmatpush1.xpose.msra.mxu0 0.0
        %686 = vmatprep.subr.mxu0 0.0
        %687 = vmatpush1.xpose.msra.mxu0 0.0
        %688 = vmatprep.subr.mxu0 0.0
        %689 = vmatpush1.xpose.msra.mxu0 0.0
        %690 = vmatprep.subr.mxu0 0.0
        %691 = vmatpush1.xpose.msra.mxu0 0.0
        %692 = vmatprep.subr.mxu0 0.0
        %693 = vmatpush1.xpose.msra.mxu0 0.0
        %694 = vmatprep.subr.mxu0 0.0
        %695 = vmatpush1.xpose.msra.mxu0 0.0
        %696 = vmatprep.subr.mxu0 0.0
        %697 = vmatpush1.xpose.msra.mxu0 0.0
        %698 = vmatprep.subr.mxu0 0.0
        %699 = vmatpush1.xpose.msra.mxu0 0.0
        %700 = vmatprep.subr.mxu0 0.0
        %701 = vmatpush1.xpose.msra.mxu0 0.0
        %702 = vmatprep.subr.mxu0 0.0
        %703 = vmatpush1.xpose.msra.mxu0 0.0
        %704 = vmatprep.subr.mxu0 0.0
        %705 = vmatpush1.xpose.msra.mxu0 0.0
        %706 = vmatprep.subr.mxu0 0.0
        %707 = vmatpush1.xpose.msra.mxu0 0.0
        %708 = vmatprep.subr.mxu0 0.0
        %709 = vmatpush1.xpose.msra.mxu0 0.0
        %710 = vmatprep.subr.mxu0 0.0
        %711 = vmatpush1.xpose.msra.mxu0 0.0
        %712 = vmatprep.subr.mxu0 0.0
        %713 = vmatpush1.xpose.msra.mxu0 0.0
        %714 = vmatprep.subr.mxu0 0.0
        %715 = vmatpush1.xpose.msra.mxu0 0.0
        %716 = vmatprep.subr.mxu0 0.0
        %717 = vmatpush1.xpose.msra.mxu0 0.0
        %718 = vmatprep.subr.mxu0 0.0
        %719 = vmatpush1.xpose.msra.mxu0 0.0
        %720 = vmatprep.subr.mxu0 0.0
        %721 = vmatpush1.xpose.msra.mxu0 0.0
        %722 = vmatprep.subr.mxu0 0.0
        %723 = vmatpush1.xpose.msra.mxu0 0.0
        %724 = vmatprep.subr.mxu0 0.0
        %725 = vmatpush1.xpose.msra.mxu0 0.0
        %726 = vmatprep.subr.mxu0 0.0
        %727 = vmatpush1.xpose.msra.mxu0 0.0
        %728 = vmatprep.subr.mxu0 0.0
        %729 = vmatpush1.xpose.msra.mxu0 0.0
        %730 = vmatprep.subr.mxu0 0.0
        %731 = vmatpush1.xpose.msra.mxu0 0.0
        %732 = vmatprep.subr.mxu0 0.0
        %733 = vmatpush1.xpose.msra.mxu0 0.0
        %734 = vmatprep.subr.mxu0 0.0
        %735 = vmatpush1.xpose.msra.mxu0 0.0
        %736 = vmatprep.mubr.f32.mxu0 0.0
        %737 = vmatmul.mubr.f32.gmra.mrb[0].mxu0 %v668
        %v738 = vpop.f32.mrb[0].mxu0
        %v739 = vadd.f32 0.0, %v738
        %v740 = vpop.f32.mrb[0].mxu0
        %741 = vdwg.mxu0
        %v742 = vsel %vm503, %v739, -inf
        %743 = vmax.xlane.f32.xlu0 %v742
        %v744 = vpop.xlane.xlu0 %743
        %v745 = vsub.f32 %v739, %v744
        %v746 = vmul.f32 %v745, 1.442695
        %v747 = vpow.pop %v746
        %v748 = vsel %vm503, %v747, 0.0
        %749 = vadd.xlane.f32.xlu0 %v748
        %v750 = vpop.xlane.xlu0 %749
        %752 = vrot.lane.b32.xlu0 %v413, 120
        %v753 = vpop.permute.xlu0 %752
        %v756 = vsel %vm503, %v747, 0
        %758 = vmatprep.subr.mxu0 0.0
        %759 = vmatpush1.msra.mxu0 %v753
        %760 = vmatprep.subr.mxu0 0.0
        %761 = vmatpush1.msra.mxu0 0.0
        %762 = vmatprep.subr.mxu0 0.0
        %763 = vmatpush1.msra.mxu0 0.0
        %764 = vmatprep.subr.mxu0 0.0
        %765 = vmatpush1.msra.mxu0 0.0
        %766 = vmatprep.subr.mxu0 0.0
        %767 = vmatpush1.msra.mxu0 0.0
        %768 = vmatprep.subr.mxu0 0.0
        %769 = vmatpush1.msra.mxu0 0.0
        %770 = vmatprep.subr.mxu0 0.0
        %771 = vmatpush1.msra.mxu0 0.0
        %772 = vmatprep.subr.mxu0 0.0
        %773 = vmatpush1.msra.mxu0 0.0
        %774 = vmatprep.subr.mxu0 0.0
        %775 = vmatpush1.msra.mxu0 0.0
        %776 = vmatprep.subr.mxu0 0.0
        %777 = vmatpush1.msra.mxu0 0.0
        %778 = vmatprep.subr.mxu0 0.0
        %779 = vmatpush1.msra.mxu0 0.0
        %780 = vmatprep.subr.mxu0 0.0
        %781 = vmatpush1.msra.mxu0 0.0
        %782 = vmatprep.subr.mxu0 0.0
        %783 = vmatpush1.msra.mxu0 0.0
        %784 = vmatprep.subr.mxu0 0.0
        %785 = vmatpush1.msra.mxu0 0.0
        %786 = vmatprep.subr.mxu0 0.0
        %787 = vmatpush1.msra.mxu0 0.0
        %788 = vmatprep.subr.mxu0 0.0
        %789 = vmatpush1.msra.mxu0 0.0
        %790 = vmatprep.subr.mxu0 0.0
        %791 = vmatpush1.msra.mxu0 0.0
        %792 = vmatprep.subr.mxu0 0.0
        %793 = vmatpush1.msra.mxu0 0.0
        %794 = vmatprep.subr.mxu0 0.0
        %795 = vmatpush1.msra.mxu0 0.0
        %796 = vmatprep.subr.mxu0 0.0
        %797 = vmatpush1.msra.mxu0 0.0
        %798 = vmatprep.subr.mxu0 0.0
        %799 = vmatpush1.msra.mxu0 0.0
        %800 = vmatprep.subr.mxu0 0.0
        %801 = vmatpush1.msra.mxu0 0.0
        %802 = vmatprep.subr.mxu0 0.0
        %803 = vmatpush1.msra.mxu0 0.0
        %804 = vmatprep.subr.mxu0 0.0
        %805 = vmatpush1.msra.mxu0 0.0
        %806 = vmatprep.subr.mxu0 0.0
        %807 = vmatpush1.msra.mxu0 0.0
        %808 = vmatprep.subr.mxu0 0.0
        %809 = vmatpush1.msra.mxu0 0.0
        %810 = vmatprep.subr.mxu0 0.0
        %811 = vmatpush1.msra.mxu0 0.0
        %812 = vmatprep.subr.mxu0 0.0
        %813 = vmatpush1.msra.mxu0 0.0
        %814 = vmatprep.subr.mxu0 0.0
        %815 = vmatpush1.msra.mxu0 0.0
        %816 = vmatprep.subr.mxu0 0.0
        %817 = vmatpush1.msra.mxu0 0.0
        %818 = vmatprep.subr.mxu0 0.0
        %819 = vmatpush1.msra.mxu0 0.0
        %820 = vmatprep.subr.mxu0 0.0
        %821 = vmatpush1.msra.mxu0 0.0
        %822 = vmatprep.mubr.f32.mxu0 0.0
        %823 = vmatmul.mubr.f32.gmra.mrb[0].mxu0 %v756
        %v824 = vpop.f32.mrb[0].mxu0
        %v825 = vadd.f32 0.0, %v824
        %v826 = vpop.f32.mrb[0].mxu0
        %827 = vdwg.mxu0
        %v828 = vrcp.pop %v750
        %v829 = vmul.f32 %v825, %v828
        %v831 = vsel %vm503, %v829, 0
        %833 = vmatprep.subr.mxu0 0.0
        %834 = vmatpush1.msra.mxu0 %v500
        %835 = vmatprep.subr.mxu0 0.0
        %836 = vmatpush1.msra.mxu0 0.0
        %837 = vmatprep.subr.mxu0 0.0
        %838 = vmatpush1.msra.mxu0 0.0
        %839 = vmatprep.subr.mxu0 0.0
        %840 = vmatpush1.msra.mxu0 0.0
        %841 = vmatprep.subr.mxu0 0.0
        %842 = vmatpush1.msra.mxu0 0.0
        %843 = vmatprep.subr.mxu0 0.0
        %844 = vmatpush1.msra.mxu0 0.0
        %845 = vmatprep.subr.mxu0 0.0
        %846 = vmatpush1.msra.mxu0 0.0
        %847 = vmatprep.subr.mxu0 0.0
        %848 = vmatpush1.msra.mxu0 0.0
        %849 = vmatprep.subr.mxu0 0.0
        %850 = vmatpush1.msra.mxu0 0.0
        %851 = vmatprep.subr.mxu0 0.0
        %852 = vmatpush1.msra.mxu0 0.0
        %853 = vmatprep.subr.mxu0 0.0
        %854 = vmatpush1.msra.mxu0 0.0
        %855 = vmatprep.subr.mxu0 0.0
        %856 = vmatpush1.msra.mxu0 0.0
        %857 = vmatprep.subr.mxu0 0.0
        %858 = vmatpush1.msra.mxu0 0.0
        %859 = vmatprep.subr.mxu0 0.0
        %860 = vmatpush1.msra.mxu0 0.0
        %861 = vmatprep.subr.mxu0 0.0
        %862 = vmatpush1.msra.mxu0 0.0
        %863 = vmatprep.subr.mxu0 0.0
        %864 = vmatpush1.msra.mxu0 0.0
        %865 = vmatprep.subr.mxu0 0.0
        %866 = vmatpush1.msra.mxu0 0.0
        %867 = vmatprep.subr.mxu0 0.0
        %868 = vmatpush1.msra.mxu0 0.0
        %869 = vmatprep.subr.mxu0 0.0
        %870 = vmatpush1.msra.mxu0 0.0
        %871 = vmatprep.subr.mxu0 0.0
        %872 = vmatpush1.msra.mxu0 0.0
        %873 = vmatprep.subr.mxu0 0.0
        %874 = vmatpush1.msra.mxu0 0.0
        %875 = vmatprep.subr.mxu0 0.0
        %876 = vmatpush1.msra.mxu0 0.0
        %877 = vmatprep.subr.mxu0 0.0
        %878 = vmatpush1.msra.mxu0 0.0
        %879 = vmatprep.subr.mxu0 0.0
        %880 = vmatpush1.msra.mxu0 0.0
        %881 = vmatprep.subr.mxu0 0.0
        %882 = vmatpush1.msra.mxu0 0.0
        %883 = vmatprep.subr.mxu0 0.0
        %884 = vmatpush1.msra.mxu0 0.0
        %885 = vmatprep.subr.mxu0 0.0
        %886 = vmatpush1.msra.mxu0 0.0
        %887 = vmatprep.subr.mxu0 0.0
        %888 = vmatpush1.msra.mxu0 0.0
        %889 = vmatprep.subr.mxu0 0.0
        %890 = vmatpush1.msra.mxu0 0.0
        %891 = vmatprep.subr.mxu0 0.0
        %892 = vmatpush1.msra.mxu0 0.0
        %893 = vmatprep.subr.mxu0 0.0
        %894 = vmatpush1.msra.mxu0 0.0
        %895 = vmatprep.subr.mxu0 0.0
        %896 = vmatpush1.msra.mxu0 0.0
        %897 = vmatprep.mubr.f32.mxu0 0.0
        %898 = vmatmul.mubr.f32.gmra.mrb[0].mxu0 %v831
        %v899 = vpop.f32.mrb[0].mxu0
        %v900 = vadd.f32 0.0, %v899
        %v901 = vpop.f32.mrb[0].mxu0
        %902 = vdwg.mxu0
        %v904 = vsel %vm503, %v663, 0
        %906 = vmatprep.subr.mxu0 0.0
        %907 = vmatpush1.msra.mxu0 %v499
        %908 = vmatprep.subr.mxu0 0.0
        %909 = vmatpush1.msra.mxu0 0.0
        %910 = vmatprep.subr.mxu0 0.0
        %911 = vmatpush1.msra.mxu0 0.0
        %912 = vmatprep.subr.mxu0 0.0
        %913 = vmatpush1.msra.mxu0 0.0
        %914 = vmatprep.subr.mxu0 0.0
        %915 = vmatpush1.msra.mxu0 0.0
        %916 = vmatprep.subr.mxu0 0.0
        %917 = vmatpush1.msra.mxu0 0.0
        %918 = vmatprep.subr.mxu0 0.0
        %919 = vmatpush1.msra.mxu0 0.0
        %920 = vmatprep.subr.mxu0 0.0
        %921 = vmatpush1.msra.mxu0 0.0
        %922 = vmatprep.subr.mxu0 0.0
        %923 = vmatpush1.msra.mxu0 0.0
        %924 = vmatprep.subr.mxu0 0.0
        %925 = vmatpush1.msra.mxu0 0.0
        %926 = vmatprep.subr.mxu0 0.0
        %927 = vmatpush1.msra.mxu0 0.0
        %928 = vmatprep.subr.mxu0 0.0
        %929 = vmatpush1.msra.mxu0 0.0
        %930 = vmatprep.subr.mxu0 0.0
        %931 = vmatpush1.msra.mxu0 0.0
        %932 = vmatprep.subr.mxu0 0.0
        %933 = vmatpush1.msra.mxu0 0.0
        %934 = vmatprep.subr.mxu0 0.0
        %935 = vmatpush1.msra.mxu0 0.0
        %936 = vmatprep.subr.mxu0 0.0
        %937 = vmatpush1.msra.mxu0 0.0
        %938 = vmatprep.subr.mxu0 0.0
        %939 = vmatpush1.msra.mxu0 0.0
        %940 = vmatprep.subr.mxu0 0.0
        %941 = vmatpush1.msra.mxu0 0.0
        %942 = vmatprep.subr.mxu0 0.0
        %943 = vmatpush1.msra.mxu0 0.0
        %944 = vmatprep.subr.mxu0 0.0
        %945 = vmatpush1.msra.mxu0 0.0
        %946 = vmatprep.subr.mxu0 0.0
        %947 = vmatpush1.msra.mxu0 0.0
        %948 = vmatprep.subr.mxu0 0.0
        %949 = vmatpush1.msra.mxu0 0.0
        %950 = vmatprep.subr.mxu0 0.0
        %951 = vmatpush1.msra.mxu0 0.0
        %952 = vmatprep.subr.mxu0 0.0
        %953 = vmatpush1.msra.mxu0 0.0
        %954 = vmatprep.subr.mxu0 0.0
        %955 = vmatpush1.msra.mxu0 0.0
        %956 = vmatprep.subr.mxu0 0.0
        %957 = vmatpush1.msra.mxu0 0.0
        %958 = vmatprep.subr.mxu0 0.0
        %959 = vmatpush1.msra.mxu0 0.0
        %960 = vmatprep.subr.mxu0 0.0
        %961 = vmatpush1.msra.mxu0 0.0
        %962 = vmatprep.subr.mxu0 0.0
        %963 = vmatpush1.msra.mxu0 0.0
        %964 = vmatprep.subr.mxu0 0.0
        %965 = vmatpush1.msra.mxu0 0.0
        %966 = vmatprep.subr.mxu0 0.0
        %967 = vmatpush1.msra.mxu0 0.0
        %968 = vmatprep.subr.mxu0 0.0
        %969 = vmatpush1.msra.mxu0 0.0
        %970 = vmatprep.mubr.f32.mxu0 0.0
        %971 = vmatmul.mubr.f32.gmra.mrb[0].mxu0 %v904
        %v972 = vpop.f32.mrb[0].mxu0
        %v973 = vadd.f32 %v900, %v972
        %v974 = vpop.f32.mrb[0].mxu0
        %975 = vdwg.mxu0
        %976 = vrot.lane.b32.xlu0 %v496, 112
        %v977 = vpop.permute.xlu0 %976
        %978 = vrot.lane.b32.xlu0 %v412, 112
        %v979 = vpop.permute.xlu0 %978
        %v980 = vsel %vm503, %v977, 0
        %v982 = vsel %vm503, %v979, 0
        %984 = vmatprep.subr.mxu0 0.0
        %985 = vmatpush1.xpose.msra.mxu0 %v982
        %986 = vmatprep.subr.mxu0 0.0
        %987 = vmatpush1.xpose.msra.mxu0 0.0
        %988 = vmatprep.subr.mxu0 0.0
        %989 = vmatpush1.xpose.msra.mxu0 0.0
        %990 = vmatprep.subr.mxu0 0.0
        %991 = vmatpush1.xpose.msra.mxu0 0.0
        %992 = vmatprep.subr.mxu0 0.0
        %993 = vmatpush1.xpose.msra.mxu0 0.0
        %994 = vmatprep.subr.mxu0 0.0
        %995 = vmatpush1.xpose.msra.mxu0 0.0
        %996 = vmatprep.subr.mxu0 0.0
        %997 = vmatpush1.xpose.msra.mxu0 0.0
        %998 = vmatprep.subr.mxu0 0.0
        %999 = vmatpush1.xpose.msra.mxu0 0.0
        %1000 = vmatprep.subr.mxu0 0.0
        %1001 = vmatpush1.xpose.msra.mxu0 0.0
        %1002 = vmatprep.subr.mxu0 0.0
        %1003 = vmatpush1.xpose.msra.mxu0 0.0
        %1004 = vmatprep.subr.mxu0 0.0
        %1005 = vmatpush1.xpose.msra.mxu0 0.0
        %1006 = vmatprep.subr.mxu0 0.0
        %1007 = vmatpush1.xpose.msra.mxu0 0.0
        %1008 = vmatprep.subr.mxu0 0.0
        %1009 = vmatpush1.xpose.msra.mxu0 0.0
        %1010 = vmatprep.subr.mxu0 0.0
        %1011 = vmatpush1.xpose.msra.mxu0 0.0
        %1012 = vmatprep.subr.mxu0 0.0
        %1013 = vmatpush1.xpose.msra.mxu0 0.0
        %1014 = vmatprep.subr.mxu0 0.0
        %1015 = vmatpush1.xpose.msra.mxu0 0.0
        %1016 = vmatprep.subr.mxu0 0.0
        %1017 = vmatpush1.xpose.msra.mxu0 0.0
        %1018 = vmatprep.subr.mxu0 0.0
        %1019 = vmatpush1.xpose.msra.mxu0 0.0
        %1020 = vmatprep.subr.mxu0 0.0
        %1021 = vmatpush1.xpose.msra.mxu0 0.0
        %1022 = vmatprep.subr.mxu0 0.0
        %1023 = vmatpush1.xpose.msra.mxu0 0.0
        %1024 = vmatprep.subr.mxu0 0.0
        %1025 = vmatpush1.xpose.msra.mxu0 0.0
        %1026 = vmatprep.subr.mxu0 0.0
        %1027 = vmatpush1.xpose.msra.mxu0 0.0
        %1028 = vmatprep.subr.mxu0 0.0
        %1029 = vmatpush1.xpose.msra.mxu0 0.0
        %1030 = vmatprep.subr.mxu0 0.0
        %1031 = vmatpush1.xpose.msra.mxu0 0.0
        %1032 = vmatprep.subr.mxu0 0.0
        %1033 = vmatpush1.xpose.msra.mxu0 0.0
        %1034 = vmatprep.subr.mxu0 0.0
        %1035 = vmatpush1.xpose.msra.mxu0 0.0
        %1036 = vmatprep.subr.mxu0 0.0
        %1037 = vmatpush1.xpose.msra.mxu0 0.0
        %1038 = vmatprep.subr.mxu0 0.0
        %1039 = vmatpush1.xpose.msra.mxu0 0.0
        %1040 = vmatprep.subr.mxu0 0.0
        %1041 = vmatpush1.xpose.msra.mxu0 0.0
        %1042 = vmatprep.subr.mxu0 0.0
        %1043 = vmatpush1.xpose.msra.mxu0 0.0
        %1044 = vmatprep.subr.mxu0 0.0
        %1045 = vmatpush1.xpose.msra.mxu0 0.0
        %1046 = vmatprep.subr.mxu0 0.0
        %1047 = vmatpush1.xpose.msra.mxu0 0.0
        %1048 = vmatprep.mubr.f32.mxu0 0.0
        %1049 = vmatmul.mubr.f32.gmra.mrb[0].mxu0 %v980
        %v1050 = vpop.f32.mrb[0].mxu0
        %v1051 = vadd.f32 0.0, %v1050
        %v1052 = vpop.f32.mrb[0].mxu0
        %1053 = vdwg.mxu0
        %v1054 = vsel %vm503, %v1051, -inf
        %1055 = vmax.xlane.f32.xlu0 %v1054
        %v1056 = vpop.xlane.xlu0 %1055
        %v1057 = vsub.f32 %v1051, %v1056
        %v1058 = vmul.f32 %v1057, 1.442695
        %v1059 = vpow.pop %v1058
        %v1060 = vsel %vm503, %v1059, 0.0
        %1061 = vadd.xlane.f32.xlu0 %v1060
        %v1062 = vpop.xlane.xlu0 %1061
        %1063 = vrot.lane.b32.xlu0 %v413, 112
        %v1064 = vpop.permute.xlu0 %1063
        %v1067 = vsel %vm503, %v1059, 0
        %1069 = vmatprep.subr.mxu0 0.0
        %1070 = vmatpush1.msra.mxu0 %v1064
        %1071 = vmatprep.subr.mxu0 0.0
        %1072 = vmatpush1.msra.mxu0 0.0
        %1073 = vmatprep.subr.mxu0 0.0
        %1074 = vmatpush1.msra.mxu0 0.0
        %1075 = vmatprep.subr.mxu0 0.0
        %1076 = vmatpush1.msra.mxu0 0.0
        %1077 = vmatprep.subr.mxu0 0.0
        %1078 = vmatpush1.msra.mxu0 0.0
        %1079 = vmatprep.subr.mxu0 0.0
        %1080 = vmatpush1.msra.mxu0 0.0
        %1081 = vmatprep.subr.mxu0 0.0
        %1082 = vmatpush1.msra.mxu0 0.0
        %1083 = vmatprep.subr.mxu0 0.0
        %1084 = vmatpush1.msra.mxu0 0.0
        %1085 = vmatprep.subr.mxu0 0.0
        %1086 = vmatpush1.msra.mxu0 0.0
        %1087 = vmatprep.subr.mxu0 0.0
        %1088 = vmatpush1.msra.mxu0 0.0
        %1089 = vmatprep.subr.mxu0 0.0
        %1090 = vmatpush1.msra.mxu0 0.0
        %1091 = vmatprep.subr.mxu0 0.0
        %1092 = vmatpush1.msra.mxu0 0.0
        %1093 = vmatprep.subr.mxu0 0.0
        %1094 = vmatpush1.msra.mxu0 0.0
        %1095 = vmatprep.subr.mxu0 0.0
        %1096 = vmatpush1.msra.mxu0 0.0
        %1097 = vmatprep.subr.mxu0 0.0
        %1098 = vmatpush1.msra.mxu0 0.0
        %1099 = vmatprep.subr.mxu0 0.0
        %1100 = vmatpush1.msra.mxu0 0.0
        %1101 = vmatprep.subr.mxu0 0.0
        %1102 = vmatpush1.msra.mxu0 0.0
        %1103 = vmatprep.subr.mxu0 0.0
        %1104 = vmatpush1.msra.mxu0 0.0
        %1105 = vmatprep.subr.mxu0 0.0
        %1106 = vmatpush1.msra.mxu0 0.0
        %1107 = vmatprep.subr.mxu0 0.0
        %1108 = vmatpush1.msra.mxu0 0.0
        %1109 = vmatprep.subr.mxu0 0.0
        %1110 = vmatpush1.msra.mxu0 0.0
        %1111 = vmatprep.subr.mxu0 0.0
        %1112 = vmatpush1.msra.mxu0 0.0
        %1113 = vmatprep.subr.mxu0 0.0
        %1114 = vmatpush1.msra.mxu0 0.0
        %1115 = vmatprep.subr.mxu0 0.0
        %1116 = vmatpush1.msra.mxu0 0.0
        %1117 = vmatprep.subr.mxu0 0.0
        %1118 = vmatpush1.msra.mxu0 0.0
        %1119 = vmatprep.subr.mxu0 0.0
        %1120 = vmatpush1.msra.mxu0 0.0
        %1121 = vmatprep.subr.mxu0 0.0
        %1122 = vmatpush1.msra.mxu0 0.0
        %1123 = vmatprep.subr.mxu0 0.0
        %1124 = vmatpush1.msra.mxu0 0.0
        %1125 = vmatprep.subr.mxu0 0.0
        %1126 = vmatpush1.msra.mxu0 0.0
        %1127 = vmatprep.subr.mxu0 0.0
        %1128 = vmatpush1.msra.mxu0 0.0
        %1129 = vmatprep.subr.mxu0 0.0
        %1130 = vmatpush1.msra.mxu0 0.0
        %1131 = vmatprep.subr.mxu0 0.0
        %1132 = vmatpush1.msra.mxu0 0.0
        %1133 = vmatprep.mubr.f32.mxu0 0.0
        %1134 = vmatmul.mubr.f32.gmra.mrb[0].mxu0 %v1067
        %v1135 = vpop.f32.mrb[0].mxu0
        %v1136 = vadd.f32 0.0, %v1135
        %v1137 = vpop.f32.mrb[0].mxu0
        %1138 = vdwg.mxu0
        %v1139 = vrcp.pop %v1062
        %v1140 = vmul.f32 %v1136, %v1139
        %v1142 = vsel %vm503, %v1140, 0
        %1144 = vmatprep.subr.mxu0 0.0
        %1145 = vmatpush1.msra.mxu0 %v501
        %1146 = vmatprep.subr.mxu0 0.0
        %1147 = vmatpush1.msra.mxu0 0.0
        %1148 = vmatprep.subr.mxu0 0.0
        %1149 = vmatpush1.msra.mxu0 0.0
        %1150 = vmatprep.subr.mxu0 0.0
        %1151 = vmatpush1.msra.mxu0 0.0
        %1152 = vmatprep.subr.mxu0 0.0
        %1153 = vmatpush1.msra.mxu0 0.0
        %1154 = vmatprep.subr.mxu0 0.0
        %1155 = vmatpush1.msra.mxu0 0.0
        %1156 = vmatprep.subr.mxu0 0.0
        %1157 = vmatpush1.msra.mxu0 0.0
        %1158 = vmatprep.subr.mxu0 0.0
        %1159 = vmatpush1.msra.mxu0 0.0
        %1160 = vmatprep.subr.mxu0 0.0
        %1161 = vmatpush1.msra.mxu0 0.0
        %1162 = vmatprep.subr.mxu0 0.0
        %1163 = vmatpush1.msra.mxu0 0.0
        %1164 = vmatprep.subr.mxu0 0.0
        %1165 = vmatpush1.msra.mxu0 0.0
        %1166 = vmatprep.subr.mxu0 0.0
        %1167 = vmatpush1.msra.mxu0 0.0
        %1168 = vmatprep.subr.mxu0 0.0
        %1169 = vmatpush1.msra.mxu0 0.0
        %1170 = vmatprep.subr.mxu0 0.0
        %1171 = vmatpush1.msra.mxu0 0.0
        %1172 = vmatprep.subr.mxu0 0.0
        %1173 = vmatpush1.msra.mxu0 0.0
        %1174 = vmatprep.subr.mxu0 0.0
        %1175 = vmatpush1.msra.mxu0 0.0
        %1176 = vmatprep.subr.mxu0 0.0
        %1177 = vmatpush1.msra.mxu0 0.0
        %1178 = vmatprep.subr.mxu0 0.0
        %1179 = vmatpush1.msra.mxu0 0.0
        %1180 = vmatprep.subr.mxu0 0.0
        %1181 = vmatpush1.msra.mxu0 0.0
        %1182 = vmatprep.subr.mxu0 0.0
        %1183 = vmatpush1.msra.mxu0 0.0
        %1184 = vmatprep.subr.mxu0 0.0
        %1185 = vmatpush1.msra.mxu0 0.0
        %1186 = vmatprep.subr.mxu0 0.0
        %1187 = vmatpush1.msra.mxu0 0.0
        %1188 = vmatprep.subr.mxu0 0.0
        %1189 = vmatpush1.msra.mxu0 0.0
        %1190 = vmatprep.subr.mxu0 0.0
        %1191 = vmatpush1.msra.mxu0 0.0
        %1192 = vmatprep.subr.mxu0 0.0
        %1193 = vmatpush1.msra.mxu0 0.0
        %1194 = vmatprep.subr.mxu0 0.0
        %1195 = vmatpush1.msra.mxu0 0.0
        %1196 = vmatprep.subr.mxu0 0.0
        %1197 = vmatpush1.msra.mxu0 0.0
        %1198 = vmatprep.subr.mxu0 0.0
        %1199 = vmatpush1.msra.mxu0 0.0
        %1200 = vmatprep.subr.mxu0 0.0
        %1201 = vmatpush1.msra.mxu0 0.0
        %1202 = vmatprep.subr.mxu0 0.0
        %1203 = vmatpush1.msra.mxu0 0.0
        %1204 = vmatprep.subr.mxu0 0.0
        %1205 = vmatpush1.msra.mxu0 0.0
        %1206 = vmatprep.subr.mxu0 0.0
        %1207 = vmatpush1.msra.mxu0 0.0
        %1208 = vmatprep.mubr.f32.mxu0 0.0
        %1209 = vmatmul.mubr.f32.gmra.mrb[0].mxu0 %v1142
        %v1210 = vpop.f32.mrb[0].mxu0
        %v1211 = vadd.f32 0.0, %v1210
        %v1212 = vpop.f32.mrb[0].mxu0
        %1213 = vdwg.mxu0
        %v1214 = vadd.f32 %v973, %v1211
        %1215 = vrot.lane.b32.xlu0 %v496, 104
        %v1216 = vpop.permute.xlu0 %1215
        %1217 = vrot.lane.b32.xlu0 %v412, 104
        %v1218 = vpop.permute.xlu0 %1217
        %v1219 = vsel %vm503, %v1216, 0
        %v1221 = vsel %vm503, %v1218, 0
        %1223 = vmatprep.subr.mxu0 0.0
        %1224 = vmatpush1.xpose.msra.mxu0 %v1221
        %1225 = vmatprep.subr.mxu0 0.0
        %1226 = vmatpush1.xpose.msra.mxu0 0.0
        %1227 = vmatprep.subr.mxu0 0.0
        %1228 = vmatpush1.xpose.msra.mxu0 0.0
        %1229 = vmatprep.subr.mxu0 0.0
        %1230 = vmatpush1.xpose.msra.mxu0 0.0
        %1231 = vmatprep.subr.mxu0 0.0
        %1232 = vmatpush1.xpose.msra.mxu0 0.0
        %1233 = vmatprep.subr.mxu0 0.0
        %1234 = vmatpush1.xpose.msra.mxu0 0.0
        %1235 = vmatprep.subr.mxu0 0.0
        %1236 = vmatpush1.xpose.msra.mxu0 0.0
        %1237 = vmatprep.subr.mxu0 0.0
        %1238 = vmatpush1.xpose.msra.mxu0 0.0
        %1239 = vmatprep.subr.mxu0 0.0
        %1240 = vmatpush1.xpose.msra.mxu0 0.0
        %1241 = vmatprep.subr.mxu0 0.0
        %1242 = vmatpush1.xpose.msra.mxu0 0.0
        %1243 = vmatprep.subr.mxu0 0.0
        %1244 = vmatpush1.xpose.msra.mxu0 0.0
        %1245 = vmatprep.subr.mxu0 0.0
        %1246 = vmatpush1.xpose.msra.mxu0 0.0
        %1247 = vmatprep.subr.mxu0 0.0
        %1248 = vmatpush1.xpose.msra.mxu0 0.0
        %1249 = vmatprep.subr.mxu0 0.0
        %1250 = vmatpush1.xpose.msra.mxu0 0.0
        %1251 = vmatprep.subr.mxu0 0.0
        %1252 = vmatpush1.xpose.msra.mxu0 0.0
        %1253 = vmatprep.subr.mxu0 0.0
        %1254 = vmatpush1.xpose.msra.mxu0 0.0
        %1255 = vmatprep.subr.mxu0 0.0
        %1256 = vmatpush1.xpose.msra.mxu0 0.0
        %1257 = vmatprep.subr.mxu0 0.0
        %1258 = vmatpush1.xpose.msra.mxu0 0.0
        %1259 = vmatprep.subr.mxu0 0.0
        %1260 = vmatpush1.xpose.msra.mxu0 0.0
        %1261 = vmatprep.subr.mxu0 0.0
        %1262 = vmatpush1.xpose.msra.mxu0 0.0
        %1263 = vmatprep.subr.mxu0 0.0
        %1264 = vmatpush1.xpose.msra.mxu0 0.0
        %1265 = vmatprep.subr.mxu0 0.0
        %1266 = vmatpush1.xpose.msra.mxu0 0.0
        %1267 = vmatprep.subr.mxu0 0.0
        %1268 = vmatpush1.xpose.msra.mxu0 0.0
        %1269 = vmatprep.subr.mxu0 0.0
        %1270 = vmatpush1.xpose.msra.mxu0 0.0
        %1271 = vmatprep.subr.mxu0 0.0
        %1272 = vmatpush1.xpose.msra.mxu0 0.0
        %1273 = vmatprep.subr.mxu0 0.0
        %1274 = vmatpush1.xpose.msra.mxu0 0.0
        %1275 = vmatprep.subr.mxu0 0.0
        %1276 = vmatpush1.xpose.msra.mxu0 0.0
        %1277 = vmatprep.subr.mxu0 0.0
        %1278 = vmatpush1.xpose.msra.mxu0 0.0
        %1279 = vmatprep.subr.mxu0 0.0
        %1280 = vmatpush1.xpose.msra.mxu0 0.0
        %1281 = vmatprep.subr.mxu0 0.0
        %1282 = vmatpush1.xpose.msra.mxu0 0.0
        %1283 = vmatprep.subr.mxu0 0.0
        %1284 = vmatpush1.xpose.msra.mxu0 0.0
        %1285 = vmatprep.subr.mxu0 0.0
        %1286 = vmatpush1.xpose.msra.mxu0 0.0
        %1287 = vmatprep.mubr.f32.mxu0 0.0
        %1288 = vmatmul.mubr.f32.gmra.mrb[0].mxu0 %v1219
        %v1289 = vpop.f32.mrb[0].mxu0
        %v1290 = vadd.f32 0.0, %v1289
        %v1291 = vpop.f32.mrb[0].mxu0
        %1292 = vdwg.mxu0
        %v1293 = vsel %vm503, %v1290, -inf
        %1294 = vmax.xlane.f32.xlu0 %v1293
        %v1295 = vpop.xlane.xlu0 %1294
        %v1296 = vsub.f32 %v1290, %v1295
        %v1297 = vmul.f32 %v1296, 1.442695
        %v1298 = vpow.pop %v1297
        %v1299 = vsel %vm503, %v1298, 0.0
        %1300 = vadd.xlane.f32.xlu0 %v1299
        %v1301 = vpop.xlane.xlu0 %1300
        %1302 = vrot.lane.b32.xlu0 %v413, 104
        %v1303 = vpop.permute.xlu0 %1302
        %v1306 = vsel %vm503, %v1298, 0
        %1308 = vmatprep.subr.mxu0 0.0
        %1309 = vmatpush1.msra.mxu0 %v1303
        %1310 = vmatprep.subr.mxu0 0.0
        %1311 = vmatpush1.msra.mxu0 0.0
        %1312 = vmatprep.subr.mxu0 0.0
        %1313 = vmatpush1.msra.mxu0 0.0
        %1314 = vmatprep.subr.mxu0 0.0
        %1315 = vmatpush1.msra.mxu0 0.0
        %1316 = vmatprep.subr.mxu0 0.0
        %1317 = vmatpush1.msra.mxu0 0.0
        %1318 = vmatprep.subr.mxu0 0.0
        %1319 = vmatpush1.msra.mxu0 0.0
        %1320 = vmatprep.subr.mxu0 0.0
        %1321 = vmatpush1.msra.mxu0 0.0
        %1322 = vmatprep.subr.mxu0 0.0
        %1323 = vmatpush1.msra.mxu0 0.0
        %1324 = vmatprep.subr.mxu0 0.0
        %1325 = vmatpush1.msra.mxu0 0.0
        %1326 = vmatprep.subr.mxu0 0.0
        %1327 = vmatpush1.msra.mxu0 0.0
        %1328 = vmatprep.subr.mxu0 0.0
        %1329 = vmatpush1.msra.mxu0 0.0
        %1330 = vmatprep.subr.mxu0 0.0
        %1331 = vmatpush1.msra.mxu0 0.0
        %1332 = vmatprep.subr.mxu0 0.0
        %1333 = vmatpush1.msra.mxu0 0.0
        %1334 = vmatprep.subr.mxu0 0.0
        %1335 = vmatpush1.msra.mxu0 0.0
        %1336 = vmatprep.subr.mxu0 0.0
        %1337 = vmatpush1.msra.mxu0 0.0
        %1338 = vmatprep.subr.mxu0 0.0
        %1339 = vmatpush1.msra.mxu0 0.0
        %1340 = vmatprep.subr.mxu0 0.0
        %1341 = vmatpush1.msra.mxu0 0.0
        %1342 = vmatprep.subr.mxu0 0.0
        %1343 = vmatpush1.msra.mxu0 0.0
        %1344 = vmatprep.subr.mxu0 0.0
        %1345 = vmatpush1.msra.mxu0 0.0
        %1346 = vmatprep.subr.mxu0 0.0
        %1347 = vmatpush1.msra.mxu0 0.0
        %1348 = vmatprep.subr.mxu0 0.0
        %1349 = vmatpush1.msra.mxu0 0.0
        %1350 = vmatprep.subr.mxu0 0.0
        %1351 = vmatpush1.msra.mxu0 0.0
        %1352 = vmatprep.subr.mxu0 0.0
        %1353 = vmatpush1.msra.mxu0 0.0
        %1354 = vmatprep.subr.mxu0 0.0
        %1355 = vmatpush1.msra.mxu0 0.0
        %1356 = vmatprep.subr.mxu0 0.0
        %1357 = vmatpush1.msra.mxu0 0.0
        %1358 = vmatprep.subr.mxu0 0.0
        %1359 = vmatpush1.msra.mxu0 0.0
        %1360 = vmatprep.subr.mxu0 0.0
        %1361 = vmatpush1.msra.mxu0 0.0
        %1362 = vmatprep.subr.mxu0 0.0
        %1363 = vmatpush1.msra.mxu0 0.0
        %1364 = vmatprep.subr.mxu0 0.0
        %1365 = vmatpush1.msra.mxu0 0.0
        %1366 = vmatprep.subr.mxu0 0.0
        %1367 = vmatpush1.msra.mxu0 0.0
        %1368 = vmatprep.subr.mxu0 0.0
        %1369 = vmatpush1.msra.mxu0 0.0
        %1370 = vmatprep.subr.mxu0 0.0
        %1371 = vmatpush1.msra.mxu0 0.0
        %1372 = vmatprep.mubr.f32.mxu0 0.0
        %1373 = vmatmul.mubr.f32.gmra.mrb[0].mxu0 %v1306
        %v1374 = vpop.f32.mrb[0].mxu0
        %v1375 = vadd.f32 0.0, %v1374
        %v1376 = vpop.f32.mrb[0].mxu0
        %1377 = vdwg.mxu0
        %v1378 = vrcp.pop %v1301
        %v1379 = vmul.f32 %v1375, %v1378
        %v1381 = vsel %vm503, %v1379, 0
        %1383 = vmatprep.subr.mxu0 0.0
        %1384 = vmatpush1.msra.mxu0 %v502
        %1385 = vmatprep.subr.mxu0 0.0
        %1386 = vmatpush1.msra.mxu0 0.0
        %1387 = vmatprep.subr.mxu0 0.0
        %1388 = vmatpush1.msra.mxu0 0.0
        %1389 = vmatprep.subr.mxu0 0.0
        %1390 = vmatpush1.msra.mxu0 0.0
        %1391 = vmatprep.subr.mxu0 0.0
        %1392 = vmatpush1.msra.mxu0 0.0
        %1393 = vmatprep.subr.mxu0 0.0
        %1394 = vmatpush1.msra.mxu0 0.0
        %1395 = vmatprep.subr.mxu0 0.0
        %1396 = vmatpush1.msra.mxu0 0.0
        %1397 = vmatprep.subr.mxu0 0.0
        %1398 = vmatpush1.msra.mxu0 0.0
        %1399 = vmatprep.subr.mxu0 0.0
        %1400 = vmatpush1.msra.mxu0 0.0
        %1401 = vmatprep.subr.mxu0 0.0
        %1402 = vmatpush1.msra.mxu0 0.0
        %1403 = vmatprep.subr.mxu0 0.0
        %1404 = vmatpush1.msra.mxu0 0.0
        %1405 = vmatprep.subr.mxu0 0.0
        %1406 = vmatpush1.msra.mxu0 0.0
        %1407 = vmatprep.subr.mxu0 0.0
        %1408 = vmatpush1.msra.mxu0 0.0
        %1409 = vmatprep.subr.mxu0 0.0
        %1410 = vmatpush1.msra.mxu0 0.0
        %1411 = vmatprep.subr.mxu0 0.0
        %1412 = vmatpush1.msra.mxu0 0.0
        %1413 = vmatprep.subr.mxu0 0.0
        %1414 = vmatpush1.msra.mxu0 0.0
        %1415 = vmatprep.subr.mxu0 0.0
        %1416 = vmatpush1.msra.mxu0 0.0
        %1417 = vmatprep.subr.mxu0 0.0
        %1418 = vmatpush1.msra.mxu0 0.0
        %1419 = vmatprep.subr.mxu0 0.0
        %1420 = vmatpush1.msra.mxu0 0.0
        %1421 = vmatprep.subr.mxu0 0.0
        %1422 = vmatpush1.msra.mxu0 0.0
        %1423 = vmatprep.subr.mxu0 0.0
        %1424 = vmatpush1.msra.mxu0 0.0
        %1425 = vmatprep.subr.mxu0 0.0
        %1426 = vmatpush1.msra.mxu0 0.0
        %1427 = vmatprep.subr.mxu0 0.0
        %1428 = vmatpush1.msra.mxu0 0.0
        %1429 = vmatprep.subr.mxu0 0.0
        %1430 = vmatpush1.msra.mxu0 0.0
        %1431 = vmatprep.subr.mxu0 0.0
        %1432 = vmatpush1.msra.mxu0 0.0
        %1433 = vmatprep.subr.mxu0 0.0
        %1434 = vmatpush1.msra.mxu0 0.0
        %1435 = vmatprep.subr.mxu0 0.0
        %1436 = vmatpush1.msra.mxu0 0.0
        %1437 = vmatprep.subr.mxu0 0.0
        %1438 = vmatpush1.msra.mxu0 0.0
        %1439 = vmatprep.subr.mxu0 0.0
        %1440 = vmatpush1.msra.mxu0 0.0
        %1441 = vmatprep.subr.mxu0 0.0
        %1442 = vmatpush1.msra.mxu0 0.0
        %1443 = vmatprep.subr.mxu0 0.0
        %1444 = vmatpush1.msra.mxu0 0.0
        %1445 = vmatprep.subr.mxu0 0.0
        %1446 = vmatpush1.msra.mxu0 0.0
        %1447 = vmatprep.mubr.f32.mxu0 0.0
        %1448 = vmatmul.mubr.f32.gmra.mrb[0].mxu0 %v1381
        %v1449 = vpop.f32.mrb[0].mxu0
        %v1450 = vadd.f32 0.0, %v1449
        %v1451 = vpop.f32.mrb[0].mxu0
        %1452 = vdwg.mxu0
        %v1453 = vadd.f32 %v1214, %v1450
        %v1454 = vld [vmem:[%s6] sm:$0x1]
        %v1456 = vlaneseq
        %v1457 = vshrl.u32 %v1456, 7
        %v1458 = vsub.s32 0, %v1457
        %v1459 = vrot.slane %v1454, %v1458
        %v1461 = vadd.f32 %v1453, %v1459
        %1462 = vst.msk [vmem:[%s410] sm:$0xff] %vm425, %v1461
        %s1463 = sand.u32 %s214, 1
        %s1464 = scalar_lea.sflag [#allocation4], %s1463
        %s1465 = sand.u32 %s214, 1
        %s1466 = smul.addr %s1465, 8
        %s1467 = scalar_lea.vmem [#allocation11], %s1466
        // Predicated region
        $region69: #{tpu_custom_call.1} parent=47 // pred_check
          %p1468 = pneg %p224
        $region70: #{tpu_custom_call.1} parent=47 // pred_check_branch
          %1470 = sbr.rel (%p1468) target = $region72
        $region71: #{tpu_custom_call.1} parent=47 // pred_region
          %s1472 = ssub.s32 128, 128
          %1473 = vsyncadd %s1464, %s1472
          %s1474 = sadd.s32 %s33, %s32
          %s1475 = smul.addr %s1474, 128
          %s1476 = scalar_lea.hbm %s7, %s1475
          %s1478 = sshll.u32 %s1467, 4
          %s1479 = int_to_ptr.vmem [resolvable:$true] %s1478
          %1481 = dma.vmem_to_hbm [thread:$0]  %s1479, 128, %s1476, %s1464
        $region72: #{tpu_custom_call.1} parent=47 // pred_fallthru
          _
      $region48: #{tpu_custom_call.1} parent=5 // pred_fallthru
        _
      %p1482 = scmp.le.s32.totalorder 2, %s23
      // Predicated region
      $region73: #{tpu_custom_call.1} parent=5 // pred_check
        %p1483 = pneg %p1482
      $region74: #{tpu_custom_call.1} parent=5 // pred_check_branch
        %1485 = sbr.rel (%p1483) target = $region76
      $region75: #{tpu_custom_call.1} parent=5 // pred_region
        %s1486 = ssub.s32 %s23, 2
        // Predicated region
        $region77: #{tpu_custom_call.1} parent=75 // pred_check
          %p1487 = pneg %p230
        $region78: #{tpu_custom_call.1} parent=75 // pred_check_branch
          %1489 = sbr.rel (%p1487) target = $region80
        $region79: #{tpu_custom_call.1} parent=75 // pred_region
          %s1490 = sand.u32 %s215, 1
          %s1491 = scalar_lea.sflag [#allocation4], %s1490
          %s1492 = sand.u32 %s215, 1
          %s1493 = smul.addr %s1492, 8
          %s1494 = scalar_lea.vmem [#allocation11], %s1493
          %1495 = dma.done %s1491, 128
        $region80: #{tpu_custom_call.1} parent=75 // pred_fallthru
          _
      $region76: #{tpu_custom_call.1} parent=5 // pred_fallthru
        _
    $region6: #{tpu_custom_call.1} parent=1 // loop_footer
      %s27 = sadd.s32 1, %s23
    $region7: #{tpu_custom_call.1} parent=1 // loop_footer_branch
      %22 = sbr.rel target = $region3
    $region8: #{tpu_custom_call.1} parent=1 // loop_exit
      _
    %1496 = vsyncpa [#allocation3], 1
    %s1497 = scalar_lea.sflag [#allocation3], 1
    %1498 = vsyncpa %s1497, 1
    %1499 = vsyncpa [#allocation6], 1
    %s1500 = scalar_lea.sflag [#allocation6], 1
    %1501 = vsyncpa %s1500, 1
    %1502 = vsyncpa [#allocation9], 1
    %1503 = vsyncpa [#allocation4], 1
    %s1504 = scalar_lea.sflag [#allocation4], 1
    %1505 = vsyncpa %s1504, 1

</llo_original>
